<compile_context>
chip_gen: v6e
topology: v6e:2x2x1
jax: 0.10.0
libtpu: 0.0.40
codegen_flags: <defaults>
</compile_context>

<pallas_src>
import functools

import jax
import jax.numpy as jnp
from jax import lax
from jax.experimental import pallas as pl
from jax.experimental.pallas import tpu as pltpu


def _conv_ap_kernel(x_ref, p_ref, w_ref, b_ref, o_ref, acc_ref, *, c_in, b_blk):
    # x_ref:   (b_blk*C_in, hw_blk)   rows = samples-major, channels-minor; lanes = HW
    # p_ref:   (K, hw_blk)            adaptive-avg-pool matrix tile (lane-dense)
    # w_ref:   (C_out, C_in)          1x1 conv weight (PyTorch layout, squeezed)
    # b_ref:   (C_out, 1)             conv bias
    # o_ref:   (b_blk, C_out, K)      pooled + conv + L2-normalized output
    # acc_ref: (b_blk*C_in, K) f32    pooled-x accumulator across HW tiles
    j = pl.program_id(1)

    @pl.when(j == 0)
    def _():
        acc_ref[...] = jnp.zeros_like(acc_ref)

    # Pooling partial sum: contract the shared HW (lane) axis of x and P.
    # (b_blk*C_in, hw_blk) . (K, hw_blk) -> (b_blk*C_in, K)
    acc_ref[...] += lax.dot_general(
        x_ref[...], p_ref[...],
        dimension_numbers=(((1,), (1,)), ((), ())),
        preferred_element_type=jnp.float32)

    @pl.when(j == pl.num_programs(1) - 1)
    def _():
        w = w_ref[...]        # (C_out, C_in)
        bias = b_ref[...]     # (C_out, 1)
        # b_blk is small and static -> unrolled per-sample epilogue (tiny matmuls).
        for s in range(b_blk):
            pooled_s = acc_ref[pl.ds(s * c_in, c_in), :]          # (C_in, K)
            # 1x1 conv after pooling (bias add is exact: pool rows average to 1).
            y = jnp.dot(w, pooled_s, preferred_element_type=jnp.float32) + bias
            # F.normalize: y / max(||y||_2, 1e-12)  ==  y * rsqrt(max(ss, 1e-24))
            ss = jnp.sum(y * y)
            inv = lax.rsqrt(jnp.maximum(ss, 1e-24))
            o_ref[s] = y * inv


def _pick_batch_tile(batch, c_in, cap=8):
    """Samples per grid step: all of B if small, else a divisor keeping rows 8-aligned."""
    if batch <= cap:
        return batch
    for d in range(cap, 0, -1):
        if batch % d == 0 and (d * c_in) % 8 == 0:
            return d
    return 1


def _pick_hw_tile(hw, cap):
    """Largest 128-multiple divisor of HW that fits the VMEM budget (else single tile)."""
    if hw <= cap:
        return hw
    t = (cap // 128) * 128
    while t >= 128:
        if hw % t == 0:
            return t
        t -= 128
    return hw


@functools.partial(jax.jit, static_argnames=("s1", "s2"))
def image_conv_ap(x_nchw, weight, bias, *, s1=2, s2=2):
    """x_nchw: (B, C_in, H, W); weight: (C_out, C_in) (Conv2d 1x1, squeezed); bias: (C_out,)."""
    B, C_in, H, W = x_nchw.shape
    C_out = weight.shape[0]
    HW = H * W
    K = s1 * s2

    assert H % s1 == 0 and W % s2 == 0, "adaptive pool with non-divisible sizes"
    bh, bw = H // s1, W // s2

    # Free reshape: NCHW is already contiguous with HW last.  Rows are (b, c)-major.
    x2d = x_nchw.reshape(B * C_in, HW)

    # Pooling matrix, lane-dense: P[k, h*W + w] = 1/(bh*bw) if pixel (h, w) is in block k.
    h_idx = jnp.arange(H) // bh
    w_idx = jnp.arange(W) // bw
    block_of_pixel = (h_idx[:, None] * s2 + w_idx[None, :]).reshape(HW)         # (HW,)
    pool_mat = (jnp.arange(K)[:, None] == block_of_pixel[None, :]).astype(
        jnp.float32) / float(bh * bw)                                            # (K, HW)

    bias2d = bias.reshape(C_out, 1).astype(jnp.float32)

    # Tiling: batch samples per step, HW streamed as a reduction axis under a VMEM budget.
    b_blk = _pick_batch_tile(B, C_in)
    x_block_budget = 4 * 1024 * 1024                                             # bytes
    hw_cap = max(128, x_block_budget // (4 * b_blk * C_in))
    hw_blk = _pick_hw_tile(HW, hw_cap)
    nb = B // b_blk
    nh = HW // hw_blk

    out = pl.pallas_call(
        functools.partial(_conv_ap_kernel, c_in=C_in, b_blk=b_blk),
        out_shape=jax.ShapeDtypeStruct((B, C_out, K), jnp.float32),
        grid_spec=pltpu.PrefetchScalarGridSpec(
            num_scalar_prefetch=0,
            grid=(nb, nh),                                   # (batch tiles, HW tiles)
            in_specs=[
                pl.BlockSpec((b_blk * C_in, hw_blk), lambda i, j: (i, j)),   # x
                pl.BlockSpec((K, hw_blk), lambda i, j: (0, j)),              # pool matrix
                pl.BlockSpec((C_out, C_in), lambda i, j: (0, 0)),            # weight
                pl.BlockSpec((C_out, 1), lambda i, j: (0, 0)),               # bias
            ],
            out_specs=pl.BlockSpec((b_blk, C_out, K), lambda i, j: (i, 0, 0)),
            scratch_shapes=[pltpu.VMEM((b_blk * C_in, K), jnp.float32)],
        ),
        compiler_params=pltpu.CompilerParams(
            dimension_semantics=("parallel", "arbitrary"),   # batch parallel, HW reduction
            vmem_limit_bytes=32 * 1024 * 1024,
        ),
    )(x2d, pool_mat, weight.astype(jnp.float32), bias2d)

    # (B, C_out, K) -> (B, C_out*K): exactly flatten(1) order, contiguous (no transpose).
    return out.reshape(B, C_out * K)


def _reference(x_nchw, weight, bias, s1=2, s2=2):
    """Pure-JAX reference mirroring the PyTorch module (conv -> pool -> normalize)."""
    B, C_in, H, W = x_nchw.shape
    C_out = weight.shape[0]
    y = jnp.einsum("bchw,oc->bohw", x_nchw, weight) + bias[None, :, None, None]
    y = y.reshape(B, C_out, s1, H // s1, s2, W // s2).mean(axis=(3, 5))
    flat = y.reshape(B, -1)
    norm = jnp.sqrt(jnp.sum(flat * flat, axis=1, keepdims=True))
    return flat / jnp.maximum(norm, 1e-12)


if __name__ == "__main__":
    B, C_in, H, W = 2, 4, 16, 16
    C_out, s1, s2 = 512, 2, 2

    key = jax.random.PRNGKey(0)
    kx, kw, kb = jax.random.split(key, 3)

    x = jax.random.normal(kx, (B, C_in, H, W), dtype=jnp.float32)
    # Conv2d 1x1 weight in native PyTorch layout (C_out, C_in) (kernel dims squeezed).
    weight = jax.random.normal(kw, (C_out, C_in), dtype=jnp.float32) * 0.1
    bias = jax.random.normal(kb, (C_out,), dtype=jnp.float32) * 0.05

    out = image_conv_ap(x, weight, bias, s1=s1, s2=s2)
    jax.block_until_ready(out)

    ref = _reference(x, weight, bias, s1=s1, s2=s2)
    assert out.shape == (B, C_out * s1 * s2)
    assert jnp.allclose(out, ref, atol=1e-5, rtol=1e-5), "mismatch vs reference"

    print("KERNEL_OK")
</pallas_src>

<mosaic_0001>
module attributes {stable_mosaic.version = 11 : i64} {
  func.func @_conv_ap_kernel(%arg0: i32, %arg1: i32, %arg2: memref<8x256xf32, #tpu.memory_space<vmem>>, %arg3: memref<4x256xf32, #tpu.memory_space<vmem>>, %arg4: memref<512x4xf32, #tpu.memory_space<vmem>>, %arg5: memref<512x1xf32, #tpu.memory_space<vmem>>, %arg6: memref<2x512x4xf32, #tpu.memory_space<vmem>>, %arg7: memref<8x4xf32, #tpu.memory_space<vmem>>) attributes {dimension_semantics = [#tpu.dimension_semantics<parallel>, #tpu.dimension_semantics<arbitrary>], iteration_bounds = array<i64: 1, 1>, scalar_prefetch = 0 : i64, scratch_operands = 1 : i64, tpu.core_type = #tpu.core_type<tc>, window_params = [{transform_indices = @transform_0, window_bounds = array<i64: 8, 256>}, {transform_indices = @transform_1, window_bounds = array<i64: 4, 256>}, {pipeline_mode = #tpu.pipeline_mode<synchronous>, transform_indices = @transform_2, window_bounds = array<i64: 512, 4>}, {pipeline_mode = #tpu.pipeline_mode<synchronous>, transform_indices = @transform_3, window_bounds = array<i64: 512, 1>}, {transform_indices = @transform_4, window_bounds = array<i64: 2, 512, 4>}]} {
    %c0_i32 = arith.constant 0 : i32
    %0 = arith.cmpi eq, %arg1, %c0_i32 : i32
    %1 = arith.extui %0 : i1 to i32
    %c0_i32_0 = arith.constant 0 : i32
    %2 = arith.cmpi ne, %1, %c0_i32_0 : i32
    scf.if %2 {
      %cst_10 = arith.constant 0.000000e+00 : f32
      %12 = vector.broadcast %cst_10 : f32 to vector<8x4xf32>
      %c0_11 = arith.constant 0 : index
      %c0_12 = arith.constant 0 : index
      %13 = vector.load %arg7[%c0_11, %c0_12] : memref<8x4xf32, #tpu.memory_space<vmem>>, vector<8x4xf32>
      tpu.vector_store %arg7[%c0_11, %c0_12], %12 {strides = array<i32>} : memref<8x4xf32, #tpu.memory_space<vmem>>, vector<8x4xf32>,
    } else {
    }
    %c0 = arith.constant 0 : index
    %c0_1 = arith.constant 0 : index
    %3 = vector.load %arg7[%c0, %c0_1] : memref<8x4xf32, #tpu.memory_space<vmem>>, vector<8x4xf32>
    %c0_2 = arith.constant 0 : index
    %c0_3 = arith.constant 0 : index
    %4 = vector.load %arg2[%c0_2, %c0_3] : memref<8x256xf32, #tpu.memory_space<vmem>>, vector<8x256xf32>
    %c0_4 = arith.constant 0 : index
    %c0_5 = arith.constant 0 : index
    %5 = vector.load %arg3[%c0_4, %c0_5] : memref<4x256xf32, #tpu.memory_space<vmem>>, vector<4x256xf32>
    %cst = arith.constant dense<0.000000e+00> : vector<8x4xf32>
    %6 = tpu.matmul %4, %5, %cst {dimension_numbers = #tpu.dot_dimension_numbers<[1], [1], [0], [0], [0, 0, 1, 0], [], []>} : vector<8x256xf32>, vector<4x256xf32>, vector<8x4xf32> -> vector<8x4xf32>
    %7 = arith.addf %3, %6 : vector<8x4xf32>
    %c0_6 = arith.constant 0 : index
    %c0_7 = arith.constant 0 : index
    %8 = vector.load %arg7[%c0_6, %c0_7] : memref<8x4xf32, #tpu.memory_space<vmem>>, vector<8x4xf32>
    tpu.vector_store %arg7[%c0_6, %c0_7], %7 {strides = array<i32>} : memref<8x4xf32, #tpu.memory_space<vmem>>, vector<8x4xf32>,
    %c0_i32_8 = arith.constant 0 : i32
    %9 = arith.cmpi eq, %arg1, %c0_i32_8 : i32
    %10 = arith.extui %9 : i1 to i32
    %c0_i32_9 = arith.constant 0 : i32
    %11 = arith.cmpi ne, %10, %c0_i32_9 : i32
    scf.if %11 {
      %c0_10 = arith.constant 0 : index
      %c0_11 = arith.constant 0 : index
      %12 = vector.load %arg4[%c0_10, %c0_11] : memref<512x4xf32, #tpu.memory_space<vmem>>, vector<512x4xf32>
      %c0_12 = arith.constant 0 : index
      %c0_13 = arith.constant 0 : index
      %13 = vector.load %arg5[%c0_12, %c0_13] : memref<512x1xf32, #tpu.memory_space<vmem>>, vector<512x1xf32>
      %c0_14 = arith.constant 0 : index
      %c0_15 = arith.constant 0 : index
      %14 = vector.load %arg7[%c0_14, %c0_15] : memref<8x4xf32, #tpu.memory_space<vmem>>, vector<4x4xf32>
      %cst_16 = arith.constant dense<0.000000e+00> : vector<512x4xf32>
      %15 = tpu.matmul %12, %14, %cst_16 {dimension_numbers = #tpu.dot_dimension_numbers<[1], [0], [0], [1], [0, 0, 1, 1], [], []>} : vector<512x4xf32>, vector<4x4xf32>, vector<512x4xf32> -> vector<512x4xf32>
      %16 = vector.broadcast %13 : vector<512x1xf32> to vector<512x4xf32>
      %17 = arith.addf %15, %16 : vector<512x4xf32>
      %18 = arith.mulf %17, %17 : vector<512x4xf32>
      %19 = vector.shape_cast %18 : vector<512x4xf32> to vector<1x512x4xf32>
      %cst_17 = arith.constant dense<0.000000e+00> : vector<1xf32>
      %20 = vector.multi_reduction <add>, %19, %cst_17 [1, 2] : vector<1x512x4xf32> to vector<1xf32>
      %21 = vector.shape_cast %20 : vector<1xf32> to vector<1x1x1xf32>
      %22 = vector.extract %21[0, 0, 0] : f32 from vector<1x1x1xf32>
      %cst_18 = arith.constant 1.000000e-24 : f32
      %23 = arith.maximumf %22, %cst_18 : f32
      %24 = math.rsqrt %23 : f32
      %25 = vector.broadcast %24 : f32 to vector<512x4xf32>
      %26 = arith.mulf %17, %25 : vector<512x4xf32>
      %c0_19 = arith.constant 0 : index
      %c0_20 = arith.constant 0 : index
      %c0_21 = arith.constant 0 : index
      %27 = vector.load %arg6[%c0_19, %c0_20, %c0_21] : memref<2x512x4xf32, #tpu.memory_space<vmem>>, vector<1x512x4xf32>
      %28 = vector.shape_cast %27 : vector<1x512x4xf32> to vector<512x4xf32>
      %29 = vector.shape_cast %26 : vector<512x4xf32> to vector<1x512x4xf32>
      tpu.vector_store %arg6[%c0_19, %c0_20, %c0_21], %29 {strides = array<i32>} : memref<2x512x4xf32, #tpu.memory_space<vmem>>, vector<1x512x4xf32>,
      %c4 = arith.constant 4 : index
      %c0_22 = arith.constant 0 : index
      %30 = vector.load %arg7[%c4, %c0_22] : memref<8x4xf32, #tpu.memory_space<vmem>>, vector<4x4xf32>
      %cst_23 = arith.constant dense<0.000000e+00> : vector<512x4xf32>
      %31 = tpu.matmul %12, %30, %cst_23 {dimension_numbers = #tpu.dot_dimension_numbers<[1], [0], [0], [1], [0, 0, 1, 1], [], []>} : vector<512x4xf32>, vector<4x4xf32>, vector<512x4xf32> -> vector<512x4xf32>
      %32 = vector.broadcast %13 : vector<512x1xf32> to vector<512x4xf32>
      %33 = arith.addf %31, %32 : vector<512x4xf32>
      %34 = arith.mulf %33, %33 : vector<512x4xf32>
      %35 = vector.shape_cast %34 : vector<512x4xf32> to vector<1x512x4xf32>
      %cst_24 = arith.constant dense<0.000000e+00> : vector<1xf32>
      %36 = vector.multi_reduction <add>, %35, %cst_24 [1, 2] : vector<1x512x4xf32> to vector<1xf32>
      %37 = vector.shape_cast %36 : vector<1xf32> to vector<1x1x1xf32>
      %38 = vector.extract %37[0, 0, 0] : f32 from vector<1x1x1xf32>
      %cst_25 = arith.constant 1.000000e-24 : f32
      %39 = arith.maximumf %38, %cst_25 : f32
      %40 = math.rsqrt %39 : f32
      %41 = vector.broadcast %40 : f32 to vector<512x4xf32>
      %42 = arith.mulf %33, %41 : vector<512x4xf32>
      %c1 = arith.constant 1 : index
      %c0_26 = arith.constant 0 : index
      %c0_27 = arith.constant 0 : index
      %43 = vector.load %arg6[%c1, %c0_26, %c0_27] : memref<2x512x4xf32, #tpu.memory_space<vmem>>, vector<1x512x4xf32>
      %44 = vector.shape_cast %43 : vector<1x512x4xf32> to vector<512x4xf32>
      %45 = vector.shape_cast %42 : vector<512x4xf32> to vector<1x512x4xf32>
      tpu.vector_store %arg6[%c1, %c0_26, %c0_27], %45 {strides = array<i32>} : memref<2x512x4xf32, #tpu.memory_space<vmem>>, vector<1x512x4xf32>,
    } else {
    }
    return
  }
  func.func @transform_0(%arg0: i32, %arg1: i32) -> (i32, i32) {
    %c0_i32 = arith.constant 0 : i32
    return %arg0, %arg1 : i32, i32
  }
  func.func @transform_1(%arg0: i32, %arg1: i32) -> (i32, i32) {
    %c0_i32 = arith.constant 0 : i32
    %c0_i32_0 = arith.constant 0 : i32
    return %c0_i32, %arg1 : i32, i32
  }
  func.func @transform_2(%arg0: i32, %arg1: i32) -> (i32, i32) {
    %c0_i32 = arith.constant 0 : i32
    %c0_i32_0 = arith.constant 0 : i32
    %c0_i32_1 = arith.constant 0 : i32
    return %c0_i32, %c0_i32_0 : i32, i32
  }
  func.func @transform_3(%arg0: i32, %arg1: i32) -> (i32, i32) {
    %c0_i32 = arith.constant 0 : i32
    %c0_i32_0 = arith.constant 0 : i32
    %c0_i32_1 = arith.constant 0 : i32
    return %c0_i32, %c0_i32_0 : i32, i32
  }
  func.func @transform_4(%arg0: i32, %arg1: i32) -> (i32, i32, i32) {
    %c0_i32 = arith.constant 0 : i32
    %c0_i32_0 = arith.constant 0 : i32
    %c0_i32_1 = arith.constant 0 : i32
    return %arg0, %c0_i32, %c0_i32_0 : i32, i32, i32
  }
}

</mosaic_0001>

<llo_original>
// kernel: image_conv_ap.1
$region0: #{image_conv_ap.1}
  #allocation0 [shape = 'u32[]', space=smem, size = 0x4, offset = 0x4, fixed_abs, tag = 'smem constant byte address 0x4 - core index']
  #allocation1 [shape = 'u32[144,128]{1,0:T(1,128)}', space=vmem, size = 0x12000, scoped, tag = 'internal scratch']
  #allocation2 [shape = 'f32[8,4]{1,0:T(8,128)}', space=vmem, size = 0x1000, scoped, tag = 'scratch operand']
  %s0 = inlined_call_operand.vmem [shape: f32[8,256], index: 0, kind: input, shape index: {}]
  %s1 = inlined_call_operand.vmem [shape: f32[4,256], index: 1, kind: input, shape index: {}]
  %s2 = inlined_call_operand.vmem [shape: f32[512,4], index: 2, kind: input, shape index: {}]
  %s3 = inlined_call_operand.vmem [shape: f32[512,1], index: 3, kind: input, shape index: {}]
  %s4 = inlined_call_operand.vmem [shape: f32[2,512,4], index: 4, kind: output, shape index: {}]
  %s5 = sld [smem:[#allocation0]]
  $region34: #{image_conv_ap.1} parent=0
    _
  %s7 = ssub.s32 1, %s5
  %s8 = scalar_select 0, %s7, %s5
  // Predicated region
  $region2: #{image_conv_ap.1} parent=0 // pred_check
    _
  $region3: #{image_conv_ap.1} parent=0 // pred_check_branch
    %10 = sbr.rel (0) target = $region5
  $region4: #{image_conv_ap.1} parent=0 // pred_region
    _
  $region5: #{image_conv_ap.1} parent=0 // pred_fallthru
    _
  // Predicated region
  $region6: #{image_conv_ap.1} parent=0 // pred_check
    _
  $region7: #{image_conv_ap.1} parent=0 // pred_check_branch
    %12 = sbr.rel (0) target = $region9
  $region8: #{image_conv_ap.1} parent=0 // pred_region
    _
  $region9: #{image_conv_ap.1} parent=0 // pred_fallthru
    _
  // Predicated region
  $region10: #{image_conv_ap.1} parent=0 // pred_check
    _
  $region11: #{image_conv_ap.1} parent=0 // pred_check_branch
    %14 = sbr.rel (0) target = $region13
  $region12: #{image_conv_ap.1} parent=0 // pred_region
    _
  $region13: #{image_conv_ap.1} parent=0 // pred_fallthru
    _
  // Predicated region
  $region14: #{image_conv_ap.1} parent=0 // pred_check
    _
  $region15: #{image_conv_ap.1} parent=0 // pred_check_branch
    %16 = sbr.rel (0) target = $region17
  $region16: #{image_conv_ap.1} parent=0 // pred_region
    _
  $region17: #{image_conv_ap.1} parent=0 // pred_fallthru
    _
  %p17 = scmp.eq.s32.totalorder 0, 0
  // Predicated region
  $region18: #{image_conv_ap.1} parent=0 // pred_check
    %p18 = pneg %p17
  $region19: #{image_conv_ap.1} parent=0 // pred_check_branch
    %20 = sbr.rel (%p18) target = $region21
  $region20: #{image_conv_ap.1} parent=0 // pred_region
    %vm21 = vcmask 31744
    %22 = vst.msk [vmem:[#allocation2] sm:$0xff] %vm21, 0.0
  $region21: #{image_conv_ap.1} parent=0 // pred_fallthru
    _
  %v23 = vld [vmem:[#allocation2] sm:$0xff]
  %v24 = vld [vmem:[%s0] sm:$0xff]
  %v25 = vld [vmem:[%s0 + $0x8] sm:$0xff]
  %v26 = vld [vmem:[%s1] sm:$0xff]
  %v28 = vcombine.high %v26, %v26
  %30 = vmatprep.subr.mxu0 0.0
  %31 = vmatpush1.xpose.msra.mxu0 0.0
  %32 = vmatprep.subr.mxu0 0.0
  %33 = vmatpush1.xpose.msra.mxu0 0.0
  %34 = vmatprep.subr.mxu0 0.0
  %35 = vmatpush1.xpose.msra.mxu0 0.0
  %36 = vmatprep.subr.mxu0 0.0
  %37 = vmatpush1.xpose.msra.mxu0 0.0
  %38 = vmatprep.subr.mxu0 0.0
  %39 = vmatpush1.xpose.msra.mxu0 0.0
  %40 = vmatprep.subr.mxu0 0.0
  %41 = vmatpush1.xpose.msra.mxu0 0.0
  %42 = vmatprep.subr.mxu0 0.0
  %43 = vmatpush1.xpose.msra.mxu0 0.0
  %44 = vmatprep.subr.mxu0 0.0
  %45 = vmatpush1.xpose.msra.mxu0 0.0
  %46 = vmatprep.subr.mxu0 0.0
  %47 = vmatpush1.xpose.msra.mxu0 0.0
  %48 = vmatprep.subr.mxu0 0.0
  %49 = vmatpush1.xpose.msra.mxu0 0.0
  %50 = vmatprep.subr.mxu0 0.0
  %51 = vmatpush1.xpose.msra.mxu0 0.0
  %52 = vmatprep.subr.mxu0 0.0
  %53 = vmatpush1.xpose.msra.mxu0 0.0
  %54 = vmatprep.subr.mxu0 0.0
  %55 = vmatpush1.xpose.msra.mxu0 0.0
  %56 = vmatprep.subr.mxu0 0.0
  %57 = vmatpush1.xpose.msra.mxu0 0.0
  %58 = vmatprep.subr.mxu0 0.0
  %59 = vmatpush1.xpose.msra.mxu0 0.0
  %60 = vmatprep.subr.mxu0 %v28
  %61 = vmatpush1.xpose.msra.mxu0 %v26
  %62 = vmatprep.subr.mxu0 0.0
  %63 = vmatpush2.xpose.msra.mxu0 0.0
  %64 = vmatprep.subr.mxu0 0.0
  %65 = vmatpush2.xpose.msra.mxu0 0.0
  %66 = vmatprep.subr.mxu0 0.0
  %67 = vmatpush2.xpose.msra.mxu0 0.0
  %68 = vmatprep.subr.mxu0 0.0
  %69 = vmatpush2.xpose.msra.mxu0 0.0
  %70 = vmatprep.subr.mxu0 0.0
  %71 = vmatpush2.xpose.msra.mxu0 0.0
  %72 = vmatprep.subr.mxu0 0.0
  %73 = vmatpush2.xpose.msra.mxu0 0.0
  %74 = vmatprep.subr.mxu0 0.0
  %75 = vmatpush2.xpose.msra.mxu0 0.0
  %76 = vmatprep.subr.mxu0 0.0
  %77 = vmatpush2.xpose.msra.mxu0 0.0
  %78 = vmatprep.subr.mxu0 0.0
  %79 = vmatpush2.xpose.msra.mxu0 0.0
  %80 = vmatprep.subr.mxu0 0.0
  %81 = vmatpush2.xpose.msra.mxu0 0.0
  %82 = vmatprep.subr.mxu0 0.0
  %83 = vmatpush2.xpose.msra.mxu0 0.0
  %84 = vmatprep.subr.mxu0 0.0
  %85 = vmatpush2.xpose.msra.mxu0 0.0
  %86 = vmatprep.subr.mxu0 0.0
  %87 = vmatpush2.xpose.msra.mxu0 0.0
  %88 = vmatprep.subr.mxu0 0.0
  %89 = vmatpush2.xpose.msra.mxu0 0.0
  %90 = vmatprep.subr.mxu0 0.0
  %91 = vmatpush2.xpose.msra.mxu0 0.0
  %92 = vmatprep.subr.mxu0 0.0
  %93 = vmatpush2.xpose.msra.mxu0 0.0
  %94 = vmatprep.mubr.f32.mxu0 %v25
  %95 = vmatmul.mubr.f32.gmra.mxu0 %v24
  %v96 = vpop.f32.mrf.mxu0
  %v97 = vadd.f32 0.0, %v96
  %v98 = vpop.f32.mrf.mxu0
  %99 = vdwg.mxu0
  %v100 = vadd.f32 %v23, %v97
  %vm101 = vcmask 31744
  %102 = vst.msk [vmem:[#allocation2] sm:$0xff] %vm101, %v100
  // Predicated region
  $region22: #{image_conv_ap.1} parent=0 // pred_check
    %p103 = pneg %p17
  $region23: #{image_conv_ap.1} parent=0 // pred_check_branch
    %105 = sbr.rel (%p103) target = $region25
  $region24: #{image_conv_ap.1} parent=0 // pred_region
    %v106 = vld [vmem:[%s2] sm:$0xff]
    %v107 = vld [vmem:[%s2 + $0x8] sm:$0xff]
    %v108 = vld [vmem:[%s2 + $0x10] sm:$0xff]
    %v109 = vld [vmem:[%s2 + $0x18] sm:$0xff]
    %v110 = vld [vmem:[%s2 + $0x20] sm:$0xff]
    %v111 = vld [vmem:[%s2 + $0x28] sm:$0xff]
    %v112 = vld [vmem:[%s2 + $0x30] sm:$0xff]
    %v113 = vld [vmem:[%s2 + $0x38] sm:$0xff]
    %v114 = vld [vmem:[%s2 + $0x40] sm:$0xff]
    %v115 = vld [vmem:[%s2 + $0x48] sm:$0xff]
    %v116 = vld [vmem:[%s2 + $0x50] sm:$0xff]
    %v117 = vld [vmem:[%s2 + $0x58] sm:$0xff]
    %v118 = vld [vmem:[%s2 + $0x60] sm:$0xff]
    %v119 = vld [vmem:[%s2 + $0x68] sm:$0xff]
    %v120 = vld [vmem:[%s2 + $0x70] sm:$0xff]
    %v121 = vld [vmem:[%s2 + $0x78] sm:$0xff]
    %v122 = vld [vmem:[%s2 + $0x80] sm:$0xff]
    %v123 = vld [vmem:[%s2 + $0x88] sm:$0xff]
    %v124 = vld [vmem:[%s2 + $0x90] sm:$0xff]
    %v125 = vld [vmem:[%s2 + $0x98] sm:$0xff]
    %v126 = vld [vmem:[%s2 + $0xa0] sm:$0xff]
    %v127 = vld [vmem:[%s2 + $0xa8] sm:$0xff]
    %v128 = vld [vmem:[%s2 + $0xb0] sm:$0xff]
    %v129 = vld [vmem:[%s2 + $0xb8] sm:$0xff]
    %v130 = vld [vmem:[%s2 + $0xc0] sm:$0xff]
    %v131 = vld [vmem:[%s2 + $0xc8] sm:$0xff]
    %v132 = vld [vmem:[%s2 + $0xd0] sm:$0xff]
    %v133 = vld [vmem:[%s2 + $0xd8] sm:$0xff]
    %v134 = vld [vmem:[%s2 + $0xe0] sm:$0xff]
    %v135 = vld [vmem:[%s2 + $0xe8] sm:$0xff]
    %v136 = vld [vmem:[%s2 + $0xf0] sm:$0xff]
    %v137 = vld [vmem:[%s2 + $0xf8] sm:$0xff]
    %v138 = vld [vmem:[%s2 + $0x100] sm:$0xff]
    %v139 = vld [vmem:[%s2 + $0x108] sm:$0xff]
    %v140 = vld [vmem:[%s2 + $0x110] sm:$0xff]
    %v141 = vld [vmem:[%s2 + $0x118] sm:$0xff]
    %v142 = vld [vmem:[%s2 + $0x120] sm:$0xff]
    %v143 = vld [vmem:[%s2 + $0x128] sm:$0xff]
    %v144 = vld [vmem:[%s2 + $0x130] sm:$0xff]
    %v145 = vld [vmem:[%s2 + $0x138] sm:$0xff]
    %v146 = vld [vmem:[%s2 + $0x140] sm:$0xff]
    %v147 = vld [vmem:[%s2 + $0x148] sm:$0xff]
    %v148 = vld [vmem:[%s2 + $0x150] sm:$0xff]
    %v149 = vld [vmem:[%s2 + $0x158] sm:$0xff]
    %v150 = vld [vmem:[%s2 + $0x160] sm:$0xff]
    %v151 = vld [vmem:[%s2 + $0x168] sm:$0xff]
    %v152 = vld [vmem:[%s2 + $0x170] sm:$0xff]
    %v153 = vld [vmem:[%s2 + $0x178] sm:$0xff]
    %v154 = vld [vmem:[%s2 + $0x180] sm:$0xff]
    %v155 = vld [vmem:[%s2 + $0x188] sm:$0xff]
    %v156 = vld [vmem:[%s2 + $0x190] sm:$0xff]
    %v157 = vld [vmem:[%s2 + $0x198] sm:$0xff]
    %v158 = vld [vmem:[%s2 + $0x1a0] sm:$0xff]
    %v159 = vld [vmem:[%s2 + $0x1a8] sm:$0xff]
    %v160 = vld [vmem:[%s2 + $0x1b0] sm:$0xff]
    %v161 = vld [vmem:[%s2 + $0x1b8] sm:$0xff]
    %v162 = vld [vmem:[%s2 + $0x1c0] sm:$0xff]
    %v163 = vld [vmem:[%s2 + $0x1c8] sm:$0xff]
    %v164 = vld [vmem:[%s2 + $0x1d0] sm:$0xff]
    %v165 = vld [vmem:[%s2 + $0x1d8] sm:$0xff]
    %v166 = vld [vmem:[%s2 + $0x1e0] sm:$0xff]
    %v167 = vld [vmem:[%s2 + $0x1e8] sm:$0xff]
    %v168 = vld [vmem:[%s2 + $0x1f0] sm:$0xff]
    %v169 = vld [vmem:[%s2 + $0x1f8] sm:$0xff]
    %v170 = vld [vmem:[%s3] sm:$0xff]
    %v171 = vld [vmem:[%s3 + $0x8] sm:$0xff]
    %v172 = vld [vmem:[%s3 + $0x10] sm:$0xff]
    %v173 = vld [vmem:[%s3 + $0x18] sm:$0xff]
    %v174 = vld [vmem:[%s3 + $0x20] sm:$0xff]
    %v175 = vld [vmem:[%s3 + $0x28] sm:$0xff]
    %v176 = vld [vmem:[%s3 + $0x30] sm:$0xff]
    %v177 = vld [vmem:[%s3 + $0x38] sm:$0xff]
    %v178 = vld [vmem:[%s3 + $0x40] sm:$0xff]
    %v179 = vld [vmem:[%s3 + $0x48] sm:$0xff]
    %v180 = vld [vmem:[%s3 + $0x50] sm:$0xff]
    %v181 = vld [vmem:[%s3 + $0x58] sm:$0xff]
    %v182 = vld [vmem:[%s3 + $0x60] sm:$0xff]
    %v183 = vld [vmem:[%s3 + $0x68] sm:$0xff]
    %v184 = vld [vmem:[%s3 + $0x70] sm:$0xff]
    %v185 = vld [vmem:[%s3 + $0x78] sm:$0xff]
    %v186 = vld [vmem:[%s3 + $0x80] sm:$0xff]
    %v187 = vld [vmem:[%s3 + $0x88] sm:$0xff]
    %v188 = vld [vmem:[%s3 + $0x90] sm:$0xff]
    %v189 = vld [vmem:[%s3 + $0x98] sm:$0xff]
    %v190 = vld [vmem:[%s3 + $0xa0] sm:$0xff]
    %v191 = vld [vmem:[%s3 + $0xa8] sm:$0xff]
    %v192 = vld [vmem:[%s3 + $0xb0] sm:$0xff]
    %v193 = vld [vmem:[%s3 + $0xb8] sm:$0xff]
    %v194 = vld [vmem:[%s3 + $0xc0] sm:$0xff]
    %v195 = vld [vmem:[%s3 + $0xc8] sm:$0xff]
    %v196 = vld [vmem:[%s3 + $0xd0] sm:$0xff]
    %v197 = vld [vmem:[%s3 + $0xd8] sm:$0xff]
    %v198 = vld [vmem:[%s3 + $0xe0] sm:$0xff]
    %v199 = vld [vmem:[%s3 + $0xe8] sm:$0xff]
    %v200 = vld [vmem:[%s3 + $0xf0] sm:$0xff]
    %v201 = vld [vmem:[%s3 + $0xf8] sm:$0xff]
    %v202 = vld [vmem:[%s3 + $0x100] sm:$0xff]
    %v203 = vld [vmem:[%s3 + $0x108] sm:$0xff]
    %v204 = vld [vmem:[%s3 + $0x110] sm:$0xff]
    %v205 = vld [vmem:[%s3 + $0x118] sm:$0xff]
    %v206 = vld [vmem:[%s3 + $0x120] sm:$0xff]
    %v207 = vld [vmem:[%s3 + $0x128] sm:$0xff]
    %v208 = vld [vmem:[%s3 + $0x130] sm:$0xff]
    %v209 = vld [vmem:[%s3 + $0x138] sm:$0xff]
    %v210 = vld [vmem:[%s3 + $0x140] sm:$0xff]
    %v211 = vld [vmem:[%s3 + $0x148] sm:$0xff]
    %v212 = vld [vmem:[%s3 + $0x150] sm:$0xff]
    %v213 = vld [vmem:[%s3 + $0x158] sm:$0xff]
    %v214 = vld [vmem:[%s3 + $0x160] sm:$0xff]
    %v215 = vld [vmem:[%s3 + $0x168] sm:$0xff]
    %v216 = vld [vmem:[%s3 + $0x170] sm:$0xff]
    %v217 = vld [vmem:[%s3 + $0x178] sm:$0xff]
    %v218 = vld [vmem:[%s3 + $0x180] sm:$0xff]
    %v219 = vld [vmem:[%s3 + $0x188] sm:$0xff]
    %v220 = vld [vmem:[%s3 + $0x190] sm:$0xff]
    %v221 = vld [vmem:[%s3 + $0x198] sm:$0xff]
    %v222 = vld [vmem:[%s3 + $0x1a0] sm:$0xff]
    %v223 = vld [vmem:[%s3 + $0x1a8] sm:$0xff]
    %v224 = vld [vmem:[%s3 + $0x1b0] sm:$0xff]
    %v225 = vld [vmem:[%s3 + $0x1b8] sm:$0xff]
    %v226 = vld [vmem:[%s3 + $0x1c0] sm:$0xff]
    %v227 = vld [vmem:[%s3 + $0x1c8] sm:$0xff]
    %v228 = vld [vmem:[%s3 + $0x1d0] sm:$0xff]
    %v229 = vld [vmem:[%s3 + $0x1d8] sm:$0xff]
    %v230 = vld [vmem:[%s3 + $0x1e0] sm:$0xff]
    %v231 = vld [vmem:[%s3 + $0x1e8] sm:$0xff]
    %v232 = vld [vmem:[%s3 + $0x1f0] sm:$0xff]
    %v233 = vld [vmem:[%s3 + $0x1f8] sm:$0xff]
    %v234 = vld [vmem:[#allocation2] sm:$0xf]
    %236 = vset.pattern.permute.xlu0 0
    %237 = vperm.xlu0 %236, %v170
    %v238 = vpop.permute.xlu0 %237
    %241 = vset.pattern.permute.xlu0 0
    %242 = vperm.xlu0 %241, %v171
    %v243 = vpop.permute.xlu0 %242
    %246 = vset.pattern.permute.xlu0 0
    %247 = vperm.xlu0 %246, %v172
    %v248 = vpop.permute.xlu0 %247
    %251 = vset.pattern.permute.xlu0 0
    %252 = vperm.xlu0 %251, %v173
    %v253 = vpop.permute.xlu0 %252
    %256 = vset.pattern.permute.xlu0 0
    %257 = vperm.xlu0 %256, %v174
    %v258 = vpop.permute.xlu0 %257
    %261 = vset.pattern.permute.xlu0 0
    %262 = vperm.xlu0 %261, %v175
    %v263 = vpop.permute.xlu0 %262
    %266 = vset.pattern.permute.xlu0 0
    %267 = vperm.xlu0 %266, %v176
    %v268 = vpop.permute.xlu0 %267
    %271 = vset.pattern.permute.xlu0 0
    %272 = vperm.xlu0 %271, %v177
    %v273 = vpop.permute.xlu0 %272
    %276 = vset.pattern.permute.xlu0 0
    %277 = vperm.xlu0 %276, %v178
    %v278 = vpop.permute.xlu0 %277
    %281 = vset.pattern.permute.xlu0 0
    %282 = vperm.xlu0 %281, %v179
    %v283 = vpop.permute.xlu0 %282
    %286 = vset.pattern.permute.xlu0 0
    %287 = vperm.xlu0 %286, %v180
    %v288 = vpop.permute.xlu0 %287
    %291 = vset.pattern.permute.xlu0 0
    %292 = vperm.xlu0 %291, %v181
    %v293 = vpop.permute.xlu0 %292
    %296 = vset.pattern.permute.xlu0 0
    %297 = vperm.xlu0 %296, %v182
    %v298 = vpop.permute.xlu0 %297
    %301 = vset.pattern.permute.xlu0 0
    %302 = vperm.xlu0 %301, %v183
    %v303 = vpop.permute.xlu0 %302
    %306 = vset.pattern.permute.xlu0 0
    %307 = vperm.xlu0 %306, %v184
    %v308 = vpop.permute.xlu0 %307
    %311 = vset.pattern.permute.xlu0 0
    %312 = vperm.xlu0 %311, %v185
    %v313 = vpop.permute.xlu0 %312
    %316 = vset.pattern.permute.xlu0 0
    %317 = vperm.xlu0 %316, %v186
    %v318 = vpop.permute.xlu0 %317
    %321 = vset.pattern.permute.xlu0 0
    %322 = vperm.xlu0 %321, %v187
    %v323 = vpop.permute.xlu0 %322
    %326 = vset.pattern.permute.xlu0 0
    %327 = vperm.xlu0 %326, %v188
    %v328 = vpop.permute.xlu0 %327
    %331 = vset.pattern.permute.xlu0 0
    %332 = vperm.xlu0 %331, %v189
    %v333 = vpop.permute.xlu0 %332
    %336 = vset.pattern.permute.xlu0 0
    %337 = vperm.xlu0 %336, %v190
    %v338 = vpop.permute.xlu0 %337
    %341 = vset.pattern.permute.xlu0 0
    %342 = vperm.xlu0 %341, %v191
    %v343 = vpop.permute.xlu0 %342
    %346 = vset.pattern.permute.xlu0 0
    %347 = vperm.xlu0 %346, %v192
    %v348 = vpop.permute.xlu0 %347
    %351 = vset.pattern.permute.xlu0 0
    %352 = vperm.xlu0 %351, %v193
    %v353 = vpop.permute.xlu0 %352
    %356 = vset.pattern.permute.xlu0 0
    %357 = vperm.xlu0 %356, %v194
    %v358 = vpop.permute.xlu0 %357
    %361 = vset.pattern.permute.xlu0 0
    %362 = vperm.xlu0 %361, %v195
    %v363 = vpop.permute.xlu0 %362
    %366 = vset.pattern.permute.xlu0 0
    %367 = vperm.xlu0 %366, %v196
    %v368 = vpop.permute.xlu0 %367
    %371 = vset.pattern.permute.xlu0 0
    %372 = vperm.xlu0 %371, %v197
    %v373 = vpop.permute.xlu0 %372
    %376 = vset.pattern.permute.xlu0 0
    %377 = vperm.xlu0 %376, %v198
    %v378 = vpop.permute.xlu0 %377
    %381 = vset.pattern.permute.xlu0 0
    %382 = vperm.xlu0 %381, %v199
    %v383 = vpop.permute.xlu0 %382
    %386 = vset.pattern.permute.xlu0 0
    %387 = vperm.xlu0 %386, %v200
    %v388 = vpop.permute.xlu0 %387
    %391 = vset.pattern.permute.xlu0 0
    %392 = vperm.xlu0 %391, %v201
    %v393 = vpop.permute.xlu0 %392
    %396 = vset.pattern.permute.xlu0 0
    %397 = vperm.xlu0 %396, %v202
    %v398 = vpop.permute.xlu0 %397
    %401 = vset.pattern.permute.xlu0 0
    %402 = vperm.xlu0 %401, %v203
    %v403 = vpop.permute.xlu0 %402
    %406 = vset.pattern.permute.xlu0 0
    %407 = vperm.xlu0 %406, %v204
    %v408 = vpop.permute.xlu0 %407
    %411 = vset.pattern.permute.xlu0 0
    %412 = vperm.xlu0 %411, %v205
    %v413 = vpop.permute.xlu0 %412
    %416 = vset.pattern.permute.xlu0 0
    %417 = vperm.xlu0 %416, %v206
    %v418 = vpop.permute.xlu0 %417
    %421 = vset.pattern.permute.xlu0 0
    %422 = vperm.xlu0 %421, %v207
    %v423 = vpop.permute.xlu0 %422
    %426 = vset.pattern.permute.xlu0 0
    %427 = vperm.xlu0 %426, %v208
    %v428 = vpop.permute.xlu0 %427
    %431 = vset.pattern.permute.xlu0 0
    %432 = vperm.xlu0 %431, %v209
    %v433 = vpop.permute.xlu0 %432
    %436 = vset.pattern.permute.xlu0 0
    %437 = vperm.xlu0 %436, %v210
    %v438 = vpop.permute.xlu0 %437
    %441 = vset.pattern.permute.xlu0 0
    %442 = vperm.xlu0 %441, %v211
    %v443 = vpop.permute.xlu0 %442
    %446 = vset.pattern.permute.xlu0 0
    %447 = vperm.xlu0 %446, %v212
    %v448 = vpop.permute.xlu0 %447
    %451 = vset.pattern.permute.xlu0 0
    %452 = vperm.xlu0 %451, %v213
    %v453 = vpop.permute.xlu0 %452
    %456 = vset.pattern.permute.xlu0 0
    %457 = vperm.xlu0 %456, %v214
    %v458 = vpop.permute.xlu0 %457
    %461 = vset.pattern.permute.xlu0 0
    %462 = vperm.xlu0 %461, %v215
    %v463 = vpop.permute.xlu0 %462
    %466 = vset.pattern.permute.xlu0 0
    %467 = vperm.xlu0 %466, %v216
    %v468 = vpop.permute.xlu0 %467
    %471 = vset.pattern.permute.xlu0 0
    %472 = vperm.xlu0 %471, %v217
    %v473 = vpop.permute.xlu0 %472
    %476 = vset.pattern.permute.xlu0 0
    %477 = vperm.xlu0 %476, %v218
    %v478 = vpop.permute.xlu0 %477
    %481 = vset.pattern.permute.xlu0 0
    %482 = vperm.xlu0 %481, %v219
    %v483 = vpop.permute.xlu0 %482
    %486 = vset.pattern.permute.xlu0 0
    %487 = vperm.xlu0 %486, %v220
    %v488 = vpop.permute.xlu0 %487
    %491 = vset.pattern.permute.xlu0 0
    %492 = vperm.xlu0 %491, %v221
    %v493 = vpop.permute.xlu0 %492
    %496 = vset.pattern.permute.xlu0 0
    %497 = vperm.xlu0 %496, %v222
    %v498 = vpop.permute.xlu0 %497
    %501 = vset.pattern.permute.xlu0 0
    %502 = vperm.xlu0 %501, %v223
    %v503 = vpop.permute.xlu0 %502
    %506 = vset.pattern.permute.xlu0 0
    %507 = vperm.xlu0 %506, %v224
    %v508 = vpop.permute.xlu0 %507
    %511 = vset.pattern.permute.xlu0 0
    %512 = vperm.xlu0 %511, %v225
    %v513 = vpop.permute.xlu0 %512
    %516 = vset.pattern.permute.xlu0 0
    %517 = vperm.xlu0 %516, %v226
    %v518 = vpop.permute.xlu0 %517
    %521 = vset.pattern.permute.xlu0 0
    %522 = vperm.xlu0 %521, %v227
    %v523 = vpop.permute.xlu0 %522
    %526 = vset.pattern.permute.xlu0 0
    %527 = vperm.xlu0 %526, %v228
    %v528 = vpop.permute.xlu0 %527
    %531 = vset.pattern.permute.xlu0 0
    %532 = vperm.xlu0 %531, %v229
    %v533 = vpop.permute.xlu0 %532
    %536 = vset.pattern.permute.xlu0 0
    %537 = vperm.xlu0 %536, %v230
    %v538 = vpop.permute.xlu0 %537
    %541 = vset.pattern.permute.xlu0 0
    %542 = vperm.xlu0 %541, %v231
    %v543 = vpop.permute.xlu0 %542
    %546 = vset.pattern.permute.xlu0 0
    %547 = vperm.xlu0 %546, %v232
    %v548 = vpop.permute.xlu0 %547
    %551 = vset.pattern.permute.xlu0 0
    %552 = vperm.xlu0 %551, %v233
    %v553 = vpop.permute.xlu0 %552
    %v556 = vsel %vm101, %v106, 0
    %v559 = vsel %vm101, %v107, 0
    %v562 = vsel %vm101, %v108, 0
    %v565 = vsel %vm101, %v109, 0
    %v568 = vsel %vm101, %v110, 0
    %v571 = vsel %vm101, %v111, 0
    %v574 = vsel %vm101, %v112, 0
    %v577 = vsel %vm101, %v113, 0
    %v580 = vsel %vm101, %v114, 0
    %v583 = vsel %vm101, %v115, 0
    %v586 = vsel %vm101, %v116, 0
    %v589 = vsel %vm101, %v117, 0
    %v592 = vsel %vm101, %v118, 0
    %v595 = vsel %vm101, %v119, 0
    %v598 = vsel %vm101, %v120, 0
    %v601 = vsel %vm101, %v121, 0
    %v604 = vsel %vm101, %v122, 0
    %v607 = vsel %vm101, %v123, 0
    %v610 = vsel %vm101, %v124, 0
    %v613 = vsel %vm101, %v125, 0
    %v616 = vsel %vm101, %v126, 0
    %v619 = vsel %vm101, %v127, 0
    %v622 = vsel %vm101, %v128, 0
    %v625 = vsel %vm101, %v129, 0
    %v628 = vsel %vm101, %v130, 0
    %v631 = vsel %vm101, %v131, 0
    %v634 = vsel %vm101, %v132, 0
    %v637 = vsel %vm101, %v133, 0
    %v640 = vsel %vm101, %v134, 0
    %v643 = vsel %vm101, %v135, 0
    %v646 = vsel %vm101, %v136, 0
    %v649 = vsel %vm101, %v137, 0
    %v652 = vsel %vm101, %v138, 0
    %v655 = vsel %vm101, %v139, 0
    %v658 = vsel %vm101, %v140, 0
    %v661 = vsel %vm101, %v141, 0
    %v664 = vsel %vm101, %v142, 0
    %v667 = vsel %vm101, %v143, 0
    %v670 = vsel %vm101, %v144, 0
    %v673 = vsel %vm101, %v145, 0
    %v676 = vsel %vm101, %v146, 0
    %v679 = vsel %vm101, %v147, 0
    %v682 = vsel %vm101, %v148, 0
    %v685 = vsel %vm101, %v149, 0
    %v688 = vsel %vm101, %v150, 0
    %v691 = vsel %vm101, %v151, 0
    %v694 = vsel %vm101, %v152, 0
    %v697 = vsel %vm101, %v153, 0
    %v700 = vsel %vm101, %v154, 0
    %v703 = vsel %vm101, %v155, 0
    %v706 = vsel %vm101, %v156, 0
    %v709 = vsel %vm101, %v157, 0
    %v712 = vsel %vm101, %v158, 0
    %v715 = vsel %vm101, %v159, 0
    %v718 = vsel %vm101, %v160, 0
    %v721 = vsel %vm101, %v161, 0
    %v724 = vsel %vm101, %v162, 0
    %v727 = vsel %vm101, %v163, 0
    %v730 = vsel %vm101, %v164, 0
    %v733 = vsel %vm101, %v165, 0
    %v736 = vsel %vm101, %v166, 0
    %v739 = vsel %vm101, %v167, 0
    %v742 = vsel %vm101, %v168, 0
    %v745 = vsel %vm101, %v169, 0
    %vm747 = vcmask 1043456
    %v749 = vsel %vm747, %v234, 0
    %751 = vmatprep.subr.mxu0 0.0
    %752 = vmatpush1.msra.mxu0 0.0
    %753 = vmatprep.subr.mxu0 0.0
    %754 = vmatpush1.msra.mxu0 0.0
    %755 = vmatprep.subr.mxu0 0.0
    %756 = vmatpush1.msra.mxu0 0.0
    %757 = vmatprep.subr.mxu0 0.0
    %758 = vmatpush1.msra.mxu0 0.0
    %759 = vmatprep.subr.mxu0 0.0
    %760 = vmatpush1.msra.mxu0 0.0
    %761 = vmatprep.subr.mxu0 0.0
    %762 = vmatpush1.msra.mxu0 0.0
    %763 = vmatprep.subr.mxu0 0.0
    %764 = vmatpush1.msra.mxu0 0.0
    %765 = vmatprep.subr.mxu0 0.0
    %766 = vmatpush1.msra.mxu0 0.0
    %767 = vmatprep.subr.mxu0 0.0
    %768 = vmatpush1.msra.mxu0 0.0
    %769 = vmatprep.subr.mxu0 0.0
    %770 = vmatpush1.msra.mxu0 0.0
    %771 = vmatprep.subr.mxu0 0.0
    %772 = vmatpush1.msra.mxu0 0.0
    %773 = vmatprep.subr.mxu0 0.0
    %774 = vmatpush1.msra.mxu0 0.0
    %775 = vmatprep.subr.mxu0 0.0
    %776 = vmatpush1.msra.mxu0 0.0
    %777 = vmatprep.subr.mxu0 0.0
    %778 = vmatpush1.msra.mxu0 0.0
    %779 = vmatprep.subr.mxu0 0.0
    %780 = vmatpush1.msra.mxu0 0.0
    %781 = vmatprep.subr.mxu0 0.0
    %782 = vmatpush1.msra.mxu0 %v749
    %783 = vmatprep.subr.mxu0 0.0
    %784 = vmatpush2.msra.mxu0 0.0
    %785 = vmatprep.subr.mxu0 0.0
    %786 = vmatpush2.msra.mxu0 0.0
    %787 = vmatprep.subr.mxu0 0.0
    %788 = vmatpush2.msra.mxu0 0.0
    %789 = vmatprep.subr.mxu0 0.0
    %790 = vmatpush2.msra.mxu0 0.0
    %791 = vmatprep.subr.mxu0 0.0
    %792 = vmatpush2.msra.mxu0 0.0
    %793 = vmatprep.subr.mxu0 0.0
    %794 = vmatpush2.msra.mxu0 0.0
    %795 = vmatprep.subr.mxu0 0.0
    %796 = vmatpush2.msra.mxu0 0.0
    %797 = vmatprep.subr.mxu0 0.0
    %798 = vmatpush2.msra.mxu0 0.0
    %799 = vmatprep.subr.mxu0 0.0
    %800 = vmatpush2.msra.mxu0 0.0
    %801 = vmatprep.subr.mxu0 0.0
    %802 = vmatpush2.msra.mxu0 0.0
    %803 = vmatprep.subr.mxu0 0.0
    %804 = vmatpush2.msra.mxu0 0.0
    %805 = vmatprep.subr.mxu0 0.0
    %806 = vmatpush2.msra.mxu0 0.0
    %807 = vmatprep.subr.mxu0 0.0
    %808 = vmatpush2.msra.mxu0 0.0
    %809 = vmatprep.subr.mxu0 0.0
    %810 = vmatpush2.msra.mxu0 0.0
    %811 = vmatprep.subr.mxu0 0.0
    %812 = vmatpush2.msra.mxu0 0.0
    %813 = vmatprep.subr.mxu0 0.0
    %814 = vmatpush2.msra.mxu0 0.0
    %815 = vmatprep.mubr.f32.mxu0 0.0
    %816 = vmatmul.mubr.f32.gmra.mxu0 %v556
    %v817 = vpop.f32.mrf.mxu0
    %v818 = vadd.f32 %v238, %v817
    %v819 = vpop.f32.mrf.mxu0
    %820 = vmatprep.mubr.f32.mxu0 0.0
    %821 = vmatmul.mubr.f32.gmra.mxu0 %v559
    %v822 = vpop.f32.mrf.mxu0
    %v823 = vadd.f32 %v243, %v822
    %v824 = vpop.f32.mrf.mxu0
    %825 = vmatprep.mubr.f32.mxu0 0.0
    %826 = vmatmul.mubr.f32.gmra.mxu0 %v562
    %v827 = vpop.f32.mrf.mxu0
    %v828 = vadd.f32 %v248, %v827
    %v829 = vpop.f32.mrf.mxu0
    %830 = vmatprep.mubr.f32.mxu0 0.0
    %831 = vmatmul.mubr.f32.gmra.mxu0 %v565
    %v832 = vpop.f32.mrf.mxu0
    %v833 = vadd.f32 %v253, %v832
    %v834 = vpop.f32.mrf.mxu0
    %835 = vmatprep.mubr.f32.mxu0 0.0
    %836 = vmatmul.mubr.f32.gmra.mxu0 %v568
    %v837 = vpop.f32.mrf.mxu0
    %v838 = vadd.f32 %v258, %v837
    %v839 = vpop.f32.mrf.mxu0
    %840 = vmatprep.mubr.f32.mxu0 0.0
    %841 = vmatmul.mubr.f32.gmra.mxu0 %v571
    %v842 = vpop.f32.mrf.mxu0
    %v843 = vadd.f32 %v263, %v842
    %v844 = vpop.f32.mrf.mxu0
    %845 = vmatprep.mubr.f32.mxu0 0.0
    %846 = vmatmul.mubr.f32.gmra.mxu0 %v574
    %v847 = vpop.f32.mrf.mxu0
    %v848 = vadd.f32 %v268, %v847
    %v849 = vpop.f32.mrf.mxu0
    %850 = vmatprep.mubr.f32.mxu0 0.0
    %851 = vmatmul.mubr.f32.gmra.mxu0 %v577
    %v852 = vpop.f32.mrf.mxu0
    %v853 = vadd.f32 %v273, %v852
    %v854 = vpop.f32.mrf.mxu0
    %855 = vmatprep.mubr.f32.mxu0 0.0
    %856 = vmatmul.mubr.f32.gmra.mxu0 %v580
    %v857 = vpop.f32.mrf.mxu0
    %v858 = vadd.f32 %v278, %v857
    %v859 = vpop.f32.mrf.mxu0
    %860 = vmatprep.mubr.f32.mxu0 0.0
    %861 = vmatmul.mubr.f32.gmra.mxu0 %v583
    %v862 = vpop.f32.mrf.mxu0
    %v863 = vadd.f32 %v283, %v862
    %v864 = vpop.f32.mrf.mxu0
    %865 = vmatprep.mubr.f32.mxu0 0.0
    %866 = vmatmul.mubr.f32.gmra.mxu0 %v586
    %v867 = vpop.f32.mrf.mxu0
    %v868 = vadd.f32 %v288, %v867
    %v869 = vpop.f32.mrf.mxu0
    %870 = vmatprep.mubr.f32.mxu0 0.0
    %871 = vmatmul.mubr.f32.gmra.mxu0 %v589
    %v872 = vpop.f32.mrf.mxu0
    %v873 = vadd.f32 %v293, %v872
    %v874 = vpop.f32.mrf.mxu0
    %875 = vmatprep.mubr.f32.mxu0 0.0
    %876 = vmatmul.mubr.f32.gmra.mxu0 %v592
    %v877 = vpop.f32.mrf.mxu0
    %v878 = vadd.f32 %v298, %v877
    %v879 = vpop.f32.mrf.mxu0
    %880 = vmatprep.mubr.f32.mxu0 0.0
    %881 = vmatmul.mubr.f32.gmra.mxu0 %v595
    %v882 = vpop.f32.mrf.mxu0
    %v883 = vadd.f32 %v303, %v882
    %v884 = vpop.f32.mrf.mxu0
    %885 = vmatprep.mubr.f32.mxu0 0.0
    %886 = vmatmul.mubr.f32.gmra.mxu0 %v598
    %v887 = vpop.f32.mrf.mxu0
    %v888 = vadd.f32 %v308, %v887
    %v889 = vpop.f32.mrf.mxu0
    %890 = vmatprep.mubr.f32.mxu0 0.0
    %891 = vmatmul.mubr.f32.gmra.mxu0 %v601
    %v892 = vpop.f32.mrf.mxu0
    %v893 = vadd.f32 %v313, %v892
    %v894 = vpop.f32.mrf.mxu0
    %895 = vmatprep.mubr.f32.mxu0 0.0
    %896 = vmatmul.mubr.f32.gmra.mxu0 %v604
    %v897 = vpop.f32.mrf.mxu0
    %v898 = vadd.f32 %v318, %v897
    %v899 = vpop.f32.mrf.mxu0
    %900 = vmatprep.mubr.f32.mxu0 0.0
    %901 = vmatmul.mubr.f32.gmra.mxu0 %v607
    %v902 = vpop.f32.mrf.mxu0
    %v903 = vadd.f32 %v323, %v902
    %v904 = vpop.f32.mrf.mxu0
    %905 = vmatprep.mubr.f32.mxu0 0.0
    %906 = vmatmul.mubr.f32.gmra.mxu0 %v610
    %v907 = vpop.f32.mrf.mxu0
    %v908 = vadd.f32 %v328, %v907
    %v909 = vpop.f32.mrf.mxu0
    %910 = vmatprep.mubr.f32.mxu0 0.0
    %911 = vmatmul.mubr.f32.gmra.mxu0 %v613
    %v912 = vpop.f32.mrf.mxu0
    %v913 = vadd.f32 %v333, %v912
    %v914 = vpop.f32.mrf.mxu0
    %915 = vmatprep.mubr.f32.mxu0 0.0
    %916 = vmatmul.mubr.f32.gmra.mxu0 %v616
    %v917 = vpop.f32.mrf.mxu0
    %v918 = vadd.f32 %v338, %v917
    %v919 = vpop.f32.mrf.mxu0
    %920 = vmatprep.mubr.f32.mxu0 0.0
    %921 = vmatmul.mubr.f32.gmra.mxu0 %v619
    %v922 = vpop.f32.mrf.mxu0
    %v923 = vadd.f32 %v343, %v922
    %v924 = vpop.f32.mrf.mxu0
    %925 = vmatprep.mubr.f32.mxu0 0.0
    %926 = vmatmul.mubr.f32.gmra.mxu0 %v622
    %v927 = vpop.f32.mrf.mxu0
    %v928 = vadd.f32 %v348, %v927
    %v929 = vpop.f32.mrf.mxu0
    %930 = vmatprep.mubr.f32.mxu0 0.0
    %931 = vmatmul.mubr.f32.gmra.mxu0 %v625
    %v932 = vpop.f32.mrf.mxu0
    %v933 = vadd.f32 %v353, %v932
    %v934 = vpop.f32.mrf.mxu0
    %935 = vmatprep.mubr.f32.mxu0 0.0
    %936 = vmatmul.mubr.f32.gmra.mxu0 %v628
    %v937 = vpop.f32.mrf.mxu0
    %v938 = vadd.f32 %v358, %v937
    %v939 = vpop.f32.mrf.mxu0
    %940 = vmatprep.mubr.f32.mxu0 0.0
    %941 = vmatmul.mubr.f32.gmra.mxu0 %v631
    %v942 = vpop.f32.mrf.mxu0
    %v943 = vadd.f32 %v363, %v942
    %v944 = vpop.f32.mrf.mxu0
    %945 = vmatprep.mubr.f32.mxu0 0.0
    %946 = vmatmul.mubr.f32.gmra.mxu0 %v634
    %v947 = vpop.f32.mrf.mxu0
    %v948 = vadd.f32 %v368, %v947
    %v949 = vpop.f32.mrf.mxu0
    %950 = vmatprep.mubr.f32.mxu0 0.0
    %951 = vmatmul.mubr.f32.gmra.mxu0 %v637
    %v952 = vpop.f32.mrf.mxu0
    %v953 = vadd.f32 %v373, %v952
    %v954 = vpop.f32.mrf.mxu0
    %955 = vmatprep.mubr.f32.mxu0 0.0
    %956 = vmatmul.mubr.f32.gmra.mxu0 %v640
    %v957 = vpop.f32.mrf.mxu0
    %v958 = vadd.f32 %v378, %v957
    %v959 = vpop.f32.mrf.mxu0
    %960 = vmatprep.mubr.f32.mxu0 0.0
    %961 = vmatmul.mubr.f32.gmra.mxu0 %v643
    %v962 = vpop.f32.mrf.mxu0
    %v963 = vadd.f32 %v383, %v962
    %v964 = vpop.f32.mrf.mxu0
    %965 = vmatprep.mubr.f32.mxu0 0.0
    %966 = vmatmul.mubr.f32.gmra.mxu0 %v646
    %v967 = vpop.f32.mrf.mxu0
    %v968 = vadd.f32 %v388, %v967
    %v969 = vpop.f32.mrf.mxu0
    %970 = vmatprep.mubr.f32.mxu0 0.0
    %971 = vmatmul.mubr.f32.gmra.mxu0 %v649
    %v972 = vpop.f32.mrf.mxu0
    %v973 = vadd.f32 %v393, %v972
    %v974 = vpop.f32.mrf.mxu0
    %975 = vmatprep.mubr.f32.mxu0 0.0
    %976 = vmatmul.mubr.f32.gmra.mxu0 %v652
    %v977 = vpop.f32.mrf.mxu0
    %v978 = vadd.f32 %v398, %v977
    %v979 = vpop.f32.mrf.mxu0
    %980 = vmatprep.mubr.f32.mxu0 0.0
    %981 = vmatmul.mubr.f32.gmra.mxu0 %v655
    %v982 = vpop.f32.mrf.mxu0
    %v983 = vadd.f32 %v403, %v982
    %v984 = vpop.f32.mrf.mxu0
    %985 = vmatprep.mubr.f32.mxu0 0.0
    %986 = vmatmul.mubr.f32.gmra.mxu0 %v658
    %v987 = vpop.f32.mrf.mxu0
    %v988 = vadd.f32 %v408, %v987
    %v989 = vpop.f32.mrf.mxu0
    %990 = vmatprep.mubr.f32.mxu0 0.0
    %991 = vmatmul.mubr.f32.gmra.mxu0 %v661
    %v992 = vpop.f32.mrf.mxu0
    %v993 = vadd.f32 %v413, %v992
    %v994 = vpop.f32.mrf.mxu0
    %995 = vmatprep.mubr.f32.mxu0 0.0
    %996 = vmatmul.mubr.f32.gmra.mxu0 %v664
    %v997 = vpop.f32.mrf.mxu0
    %v998 = vadd.f32 %v418, %v997
    %v999 = vpop.f32.mrf.mxu0
    %1000 = vmatprep.mubr.f32.mxu0 0.0
    %1001 = vmatmul.mubr.f32.gmra.mxu0 %v667
    %v1002 = vpop.f32.mrf.mxu0
    %v1003 = vadd.f32 %v423, %v1002
    %v1004 = vpop.f32.mrf.mxu0
    %1005 = vmatprep.mubr.f32.mxu0 0.0
    %1006 = vmatmul.mubr.f32.gmra.mxu0 %v670
    %v1007 = vpop.f32.mrf.mxu0
    %v1008 = vadd.f32 %v428, %v1007
    %v1009 = vpop.f32.mrf.mxu0
    %1010 = vmatprep.mubr.f32.mxu0 0.0
    %1011 = vmatmul.mubr.f32.gmra.mxu0 %v673
    %v1012 = vpop.f32.mrf.mxu0
    %v1013 = vadd.f32 %v433, %v1012
    %v1014 = vpop.f32.mrf.mxu0
    %1015 = vmatprep.mubr.f32.mxu0 0.0
    %1016 = vmatmul.mubr.f32.gmra.mxu0 %v676
    %v1017 = vpop.f32.mrf.mxu0
    %v1018 = vadd.f32 %v438, %v1017
    %v1019 = vpop.f32.mrf.mxu0
    %1020 = vmatprep.mubr.f32.mxu0 0.0
    %1021 = vmatmul.mubr.f32.gmra.mxu0 %v679
    %v1022 = vpop.f32.mrf.mxu0
    %v1023 = vadd.f32 %v443, %v1022
    %v1024 = vpop.f32.mrf.mxu0
    %1025 = vmatprep.mubr.f32.mxu0 0.0
    %1026 = vmatmul.mubr.f32.gmra.mxu0 %v682
    %v1027 = vpop.f32.mrf.mxu0
    %v1028 = vadd.f32 %v448, %v1027
    %v1029 = vpop.f32.mrf.mxu0
    %1030 = vmatprep.mubr.f32.mxu0 0.0
    %1031 = vmatmul.mubr.f32.gmra.mxu0 %v685
    %v1032 = vpop.f32.mrf.mxu0
    %v1033 = vadd.f32 %v453, %v1032
    %v1034 = vpop.f32.mrf.mxu0
    %1035 = vmatprep.mubr.f32.mxu0 0.0
    %1036 = vmatmul.mubr.f32.gmra.mxu0 %v688
    %v1037 = vpop.f32.mrf.mxu0
    %v1038 = vadd.f32 %v458, %v1037
    %v1039 = vpop.f32.mrf.mxu0
    %1040 = vmatprep.mubr.f32.mxu0 0.0
    %1041 = vmatmul.mubr.f32.gmra.mxu0 %v691
    %v1042 = vpop.f32.mrf.mxu0
    %v1043 = vadd.f32 %v463, %v1042
    %v1044 = vpop.f32.mrf.mxu0
    %1045 = vmatprep.mubr.f32.mxu0 0.0
    %1046 = vmatmul.mubr.f32.gmra.mxu0 %v694
    %v1047 = vpop.f32.mrf.mxu0
    %v1048 = vadd.f32 %v468, %v1047
    %v1049 = vpop.f32.mrf.mxu0
    %1050 = vmatprep.mubr.f32.mxu0 0.0
    %1051 = vmatmul.mubr.f32.gmra.mxu0 %v697
    %v1052 = vpop.f32.mrf.mxu0
    %v1053 = vadd.f32 %v473, %v1052
    %v1054 = vpop.f32.mrf.mxu0
    %1055 = vmatprep.mubr.f32.mxu0 0.0
    %1056 = vmatmul.mubr.f32.gmra.mxu0 %v700
    %v1057 = vpop.f32.mrf.mxu0
    %v1058 = vadd.f32 %v478, %v1057
    %v1059 = vpop.f32.mrf.mxu0
    %1060 = vmatprep.mubr.f32.mxu0 0.0
    %1061 = vmatmul.mubr.f32.gmra.mxu0 %v703
    %v1062 = vpop.f32.mrf.mxu0
    %v1063 = vadd.f32 %v483, %v1062
    %v1064 = vpop.f32.mrf.mxu0
    %1065 = vmatprep.mubr.f32.mxu0 0.0
    %1066 = vmatmul.mubr.f32.gmra.mxu0 %v706
    %v1067 = vpop.f32.mrf.mxu0
    %v1068 = vadd.f32 %v488, %v1067
    %v1069 = vpop.f32.mrf.mxu0
    %1070 = vmatprep.mubr.f32.mxu0 0.0
    %1071 = vmatmul.mubr.f32.gmra.mxu0 %v709
    %v1072 = vpop.f32.mrf.mxu0
    %v1073 = vadd.f32 %v493, %v1072
    %v1074 = vpop.f32.mrf.mxu0
    %1075 = vmatprep.mubr.f32.mxu0 0.0
    %1076 = vmatmul.mubr.f32.gmra.mxu0 %v712
    %v1077 = vpop.f32.mrf.mxu0
    %v1078 = vadd.f32 %v498, %v1077
    %v1079 = vpop.f32.mrf.mxu0
    %1080 = vmatprep.mubr.f32.mxu0 0.0
    %1081 = vmatmul.mubr.f32.gmra.mxu0 %v715
    %v1082 = vpop.f32.mrf.mxu0
    %v1083 = vadd.f32 %v503, %v1082
    %v1084 = vpop.f32.mrf.mxu0
    %1085 = vmatprep.mubr.f32.mxu0 0.0
    %1086 = vmatmul.mubr.f32.gmra.mxu0 %v718
    %v1087 = vpop.f32.mrf.mxu0
    %v1088 = vadd.f32 %v508, %v1087
    %v1089 = vpop.f32.mrf.mxu0
    %1090 = vmatprep.mubr.f32.mxu0 0.0
    %1091 = vmatmul.mubr.f32.gmra.mxu0 %v721
    %v1092 = vpop.f32.mrf.mxu0
    %v1093 = vadd.f32 %v513, %v1092
    %v1094 = vpop.f32.mrf.mxu0
    %1095 = vmatprep.mubr.f32.mxu0 0.0
    %1096 = vmatmul.mubr.f32.gmra.mxu0 %v724
    %v1097 = vpop.f32.mrf.mxu0
    %v1098 = vadd.f32 %v518, %v1097
    %v1099 = vpop.f32.mrf.mxu0
    %1100 = vmatprep.mubr.f32.mxu0 0.0
    %1101 = vmatmul.mubr.f32.gmra.mxu0 %v727
    %v1102 = vpop.f32.mrf.mxu0
    %v1103 = vadd.f32 %v523, %v1102
    %v1104 = vpop.f32.mrf.mxu0
    %1105 = vmatprep.mubr.f32.mxu0 0.0
    %1106 = vmatmul.mubr.f32.gmra.mxu0 %v730
    %v1107 = vpop.f32.mrf.mxu0
    %v1108 = vadd.f32 %v528, %v1107
    %v1109 = vpop.f32.mrf.mxu0
    %1110 = vmatprep.mubr.f32.mxu0 0.0
    %1111 = vmatmul.mubr.f32.gmra.mxu0 %v733
    %v1112 = vpop.f32.mrf.mxu0
    %v1113 = vadd.f32 %v533, %v1112
    %v1114 = vpop.f32.mrf.mxu0
    %1115 = vmatprep.mubr.f32.mxu0 0.0
    %1116 = vmatmul.mubr.f32.gmra.mxu0 %v736
    %v1117 = vpop.f32.mrf.mxu0
    %v1118 = vadd.f32 %v538, %v1117
    %v1119 = vpop.f32.mrf.mxu0
    %1120 = vmatprep.mubr.f32.mxu0 0.0
    %1121 = vmatmul.mubr.f32.gmra.mxu0 %v739
    %v1122 = vpop.f32.mrf.mxu0
    %v1123 = vadd.f32 %v543, %v1122
    %v1124 = vpop.f32.mrf.mxu0
    %1125 = vmatprep.mubr.f32.mxu0 0.0
    %1126 = vmatmul.mubr.f32.gmra.mxu0 %v742
    %v1127 = vpop.f32.mrf.mxu0
    %v1128 = vadd.f32 %v548, %v1127
    %v1129 = vpop.f32.mrf.mxu0
    %1130 = vmatprep.mubr.f32.mxu0 0.0
    %1131 = vmatmul.mubr.f32.gmra.mxu0 %v745
    %v1132 = vpop.f32.mrf.mxu0
    %v1133 = vadd.f32 %v553, %v1132
    %v1134 = vpop.f32.mrf.mxu0
    %1135 = vdwg.mxu0
    %v1136 = vmul.f32 %v818, %v818
    %v1137 = vmul.f32 %v823, %v823
    %v1138 = vmul.f32 %v828, %v828
    %v1139 = vmul.f32 %v833, %v833
    %v1140 = vmul.f32 %v838, %v838
    %v1141 = vmul.f32 %v843, %v843
    %v1142 = vmul.f32 %v848, %v848
    %v1143 = vmul.f32 %v853, %v853
    %v1144 = vmul.f32 %v858, %v858
    %v1145 = vmul.f32 %v863, %v863
    %v1146 = vmul.f32 %v868, %v868
    %v1147 = vmul.f32 %v873, %v873
    %v1148 = vmul.f32 %v878, %v878
    %v1149 = vmul.f32 %v883, %v883
    %v1150 = vmul.f32 %v888, %v888
    %v1151 = vmul.f32 %v893, %v893
    %v1152 = vmul.f32 %v898, %v898
    %v1153 = vmul.f32 %v903, %v903
    %v1154 = vmul.f32 %v908, %v908
    %v1155 = vmul.f32 %v913, %v913
    %v1156 = vmul.f32 %v918, %v918
    %v1157 = vmul.f32 %v923, %v923
    %v1158 = vmul.f32 %v928, %v928
    %v1159 = vmul.f32 %v933, %v933
    %v1160 = vmul.f32 %v938, %v938
    %v1161 = vmul.f32 %v943, %v943
    %v1162 = vmul.f32 %v948, %v948
    %v1163 = vmul.f32 %v953, %v953
    %v1164 = vmul.f32 %v958, %v958
    %v1165 = vmul.f32 %v963, %v963
    %v1166 = vmul.f32 %v968, %v968
    %v1167 = vmul.f32 %v973, %v973
    %v1168 = vmul.f32 %v978, %v978
    %v1169 = vmul.f32 %v983, %v983
    %v1170 = vmul.f32 %v988, %v988
    %v1171 = vmul.f32 %v993, %v993
    %v1172 = vmul.f32 %v998, %v998
    %v1173 = vmul.f32 %v1003, %v1003
    %v1174 = vmul.f32 %v1008, %v1008
    %v1175 = vmul.f32 %v1013, %v1013
    %v1176 = vmul.f32 %v1018, %v1018
    %v1177 = vmul.f32 %v1023, %v1023
    %v1178 = vmul.f32 %v1028, %v1028
    %v1179 = vmul.f32 %v1033, %v1033
    %v1180 = vmul.f32 %v1038, %v1038
    %v1181 = vmul.f32 %v1043, %v1043
    %v1182 = vmul.f32 %v1048, %v1048
    %v1183 = vmul.f32 %v1053, %v1053
    %v1184 = vmul.f32 %v1058, %v1058
    %v1185 = vmul.f32 %v1063, %v1063
    %v1186 = vmul.f32 %v1068, %v1068
    %v1187 = vmul.f32 %v1073, %v1073
    %v1188 = vmul.f32 %v1078, %v1078
    %v1189 = vmul.f32 %v1083, %v1083
    %v1190 = vmul.f32 %v1088, %v1088
    %v1191 = vmul.f32 %v1093, %v1093
    %v1192 = vmul.f32 %v1098, %v1098
    %v1193 = vmul.f32 %v1103, %v1103
    %v1194 = vmul.f32 %v1108, %v1108
    %v1195 = vmul.f32 %v1113, %v1113
    %v1196 = vmul.f32 %v1118, %v1118
    %v1197 = vmul.f32 %v1123, %v1123
    %v1198 = vmul.f32 %v1128, %v1128
    %v1199 = vmul.f32 %v1133, %v1133
    %v1200 = vsel %vm101, %v1136, 0.0
    %v1201 = vsel %vm101, %v1137, 0.0
    %v1202 = vadd.f32 %v1200, %v1201
    %v1203 = vsel %vm101, %v1138, 0.0
    %v1204 = vadd.f32 %v1202, %v1203
    %v1205 = vsel %vm101, %v1139, 0.0
    %v1206 = vadd.f32 %v1204, %v1205
    %v1207 = vsel %vm101, %v1140, 0.0
    %v1208 = vadd.f32 %v1206, %v1207
    %v1209 = vsel %vm101, %v1141, 0.0
    %v1210 = vadd.f32 %v1208, %v1209
    %v1211 = vsel %vm101, %v1142, 0.0
    %v1212 = vadd.f32 %v1210, %v1211
    %v1213 = vsel %vm101, %v1143, 0.0
    %v1214 = vadd.f32 %v1212, %v1213
    %v1215 = vsel %vm101, %v1144, 0.0
    %v1216 = vadd.f32 %v1214, %v1215
    %v1217 = vsel %vm101, %v1145, 0.0
    %v1218 = vadd.f32 %v1216, %v1217
    %v1219 = vsel %vm101, %v1146, 0.0
    %v1220 = vadd.f32 %v1218, %v1219
    %v1221 = vsel %vm101, %v1147, 0.0
    %v1222 = vadd.f32 %v1220, %v1221
    %v1223 = vsel %vm101, %v1148, 0.0
    %v1224 = vadd.f32 %v1222, %v1223
    %v1225 = vsel %vm101, %v1149, 0.0
    %v1226 = vadd.f32 %v1224, %v1225
    %v1227 = vsel %vm101, %v1150, 0.0
    %v1228 = vadd.f32 %v1226, %v1227
    %v1229 = vsel %vm101, %v1151, 0.0
    %v1230 = vadd.f32 %v1228, %v1229
    %v1231 = vsel %vm101, %v1152, 0.0
    %v1232 = vadd.f32 %v1230, %v1231
    %v1233 = vsel %vm101, %v1153, 0.0
    %v1234 = vadd.f32 %v1232, %v1233
    %v1235 = vsel %vm101, %v1154, 0.0
    %v1236 = vadd.f32 %v1234, %v1235
    %v1237 = vsel %vm101, %v1155, 0.0
    %v1238 = vadd.f32 %v1236, %v1237
    %v1239 = vsel %vm101, %v1156, 0.0
    %v1240 = vadd.f32 %v1238, %v1239
    %v1241 = vsel %vm101, %v1157, 0.0
    %v1242 = vadd.f32 %v1240, %v1241
    %v1243 = vsel %vm101, %v1158, 0.0
    %v1244 = vadd.f32 %v1242, %v1243
    %v1245 = vsel %vm101, %v1159, 0.0
    %v1246 = vadd.f32 %v1244, %v1245
    %v1247 = vsel %vm101, %v1160, 0.0
    %v1248 = vadd.f32 %v1246, %v1247
    %v1249 = vsel %vm101, %v1161, 0.0
    %v1250 = vadd.f32 %v1248, %v1249
    %v1251 = vsel %vm101, %v1162, 0.0
    %v1252 = vadd.f32 %v1250, %v1251
    %v1253 = vsel %vm101, %v1163, 0.0
    %v1254 = vadd.f32 %v1252, %v1253
    %v1255 = vsel %vm101, %v1164, 0.0
    %v1256 = vadd.f32 %v1254, %v1255
    %v1257 = vsel %vm101, %v1165, 0.0
    %v1258 = vadd.f32 %v1256, %v1257
    %v1259 = vsel %vm101, %v1166, 0.0
    %v1260 = vadd.f32 %v1258, %v1259
    %v1261 = vsel %vm101, %v1167, 0.0
    %v1262 = vadd.f32 %v1260, %v1261
    %v1263 = vsel %vm101, %v1168, 0.0
    %v1264 = vadd.f32 %v1262, %v1263
    %v1265 = vsel %vm101, %v1169, 0.0
    %v1266 = vadd.f32 %v1264, %v1265
    %v1267 = vsel %vm101, %v1170, 0.0
    %v1268 = vadd.f32 %v1266, %v1267
    %v1269 = vsel %vm101, %v1171, 0.0
    %v1270 = vadd.f32 %v1268, %v1269
    %v1271 = vsel %vm101, %v1172, 0.0
    %v1272 = vadd.f32 %v1270, %v1271
    %v1273 = vsel %vm101, %v1173, 0.0
    %v1274 = vadd.f32 %v1272, %v1273
    %v1275 = vsel %vm101, %v1174, 0.0
    %v1276 = vadd.f32 %v1274, %v1275
    %v1277 = vsel %vm101, %v1175, 0.0
    %v1278 = vadd.f32 %v1276, %v1277
    %v1279 = vsel %vm101, %v1176, 0.0
    %v1280 = vadd.f32 %v1278, %v1279
    %v1281 = vsel %vm101, %v1177, 0.0
    %v1282 = vadd.f32 %v1280, %v1281
    %v1283 = vsel %vm101, %v1178, 0.0
    %v1284 = vadd.f32 %v1282, %v1283
    %v1285 = vsel %vm101, %v1179, 0.0
    %v1286 = vadd.f32 %v1284, %v1285
    %v1287 = vsel %vm101, %v1180, 0.0
    %v1288 = vadd.f32 %v1286, %v1287
    %v1289 = vsel %vm101, %v1181, 0.0
    %v1290 = vadd.f32 %v1288, %v1289
    %v1291 = vsel %vm101, %v1182, 0.0
    %v1292 = vadd.f32 %v1290, %v1291
    %v1293 = vsel %vm101, %v1183, 0.0
    %v1294 = vadd.f32 %v1292, %v1293
    %v1295 = vsel %vm101, %v1184, 0.0
    %v1296 = vadd.f32 %v1294, %v1295
    %v1297 = vsel %vm101, %v1185, 0.0
    %v1298 = vadd.f32 %v1296, %v1297
    %v1299 = vsel %vm101, %v1186, 0.0
    %v1300 = vadd.f32 %v1298, %v1299
    %v1301 = vsel %vm101, %v1187, 0.0
    %v1302 = vadd.f32 %v1300, %v1301
    %v1303 = vsel %vm101, %v1188, 0.0
    %v1304 = vadd.f32 %v1302, %v1303
    %v1305 = vsel %vm101, %v1189, 0.0
    %v1306 = vadd.f32 %v1304, %v1305
    %v1307 = vsel %vm101, %v1190, 0.0
    %v1308 = vadd.f32 %v1306, %v1307
    %v1309 = vsel %vm101, %v1191, 0.0
    %v1310 = vadd.f32 %v1308, %v1309
    %v1311 = vsel %vm101, %v1192, 0.0
    %v1312 = vadd.f32 %v1310, %v1311
    %v1313 = vsel %vm101, %v1193, 0.0
    %v1314 = vadd.f32 %v1312, %v1313
    %v1315 = vsel %vm101, %v1194, 0.0
    %v1316 = vadd.f32 %v1314, %v1315
    %v1317 = vsel %vm101, %v1195, 0.0
    %v1318 = vadd.f32 %v1316, %v1317
    %v1319 = vsel %vm101, %v1196, 0.0
    %v1320 = vadd.f32 %v1318, %v1319
    %v1321 = vsel %vm101, %v1197, 0.0
    %v1322 = vadd.f32 %v1320, %v1321
    %v1323 = vsel %vm101, %v1198, 0.0
    %v1324 = vadd.f32 %v1322, %v1323
    %v1325 = vsel %vm101, %v1199, 0.0
    %v1326 = vadd.f32 %v1324, %v1325
    %1327 = vadd.xlane.f32.xlu0 %v1326
    %v1328 = vpop.xlane.xlu0 %1327
    %v1329 = vrot.slane %v1328, 4
    %v1330 = vadd.f32 %v1328, %v1329
    %v1331 = vrot.slane %v1330, 2
    %v1332 = vadd.f32 %v1330, %v1331
    %v1333 = vrot.slane %v1332, 1
    %v1334 = vadd.f32 %v1332, %v1333
    %s1335 = vtos %v1334
    %s1336 = smax.f32 %s1335, 1e-24
    %v1337 = vstv %s1336
    %v1338 = vrsqrt.pop %v1337
    %s1339 = vtos %v1338
    %v1340 = vstv %s1339
    %v1341 = vmul.f32 %v818, %v1340
    %v1342 = vmul.f32 %v823, %v1340
    %v1343 = vmul.f32 %v828, %v1340
    %v1344 = vmul.f32 %v833, %v1340
    %v1345 = vmul.f32 %v838, %v1340
    %v1346 = vmul.f32 %v843, %v1340
    %v1347 = vmul.f32 %v848, %v1340
    %v1348 = vmul.f32 %v853, %v1340
    %v1349 = vmul.f32 %v858, %v1340
    %v1350 = vmul.f32 %v863, %v1340
    %v1351 = vmul.f32 %v868, %v1340
    %v1352 = vmul.f32 %v873, %v1340
    %v1353 = vmul.f32 %v878, %v1340
    %v1354 = vmul.f32 %v883, %v1340
    %v1355 = vmul.f32 %v888, %v1340
    %v1356 = vmul.f32 %v893, %v1340
    %v1357 = vmul.f32 %v898, %v1340
    %v1358 = vmul.f32 %v903, %v1340
    %v1359 = vmul.f32 %v908, %v1340
    %v1360 = vmul.f32 %v913, %v1340
    %v1361 = vmul.f32 %v918, %v1340
    %v1362 = vmul.f32 %v923, %v1340
    %v1363 = vmul.f32 %v928, %v1340
    %v1364 = vmul.f32 %v933, %v1340
    %v1365 = vmul.f32 %v938, %v1340
    %v1366 = vmul.f32 %v943, %v1340
    %v1367 = vmul.f32 %v948, %v1340
    %v1368 = vmul.f32 %v953, %v1340
    %v1369 = vmul.f32 %v958, %v1340
    %v1370 = vmul.f32 %v963, %v1340
    %v1371 = vmul.f32 %v968, %v1340
    %v1372 = vmul.f32 %v973, %v1340
    %v1373 = vmul.f32 %v978, %v1340
    %v1374 = vmul.f32 %v983, %v1340
    %v1375 = vmul.f32 %v988, %v1340
    %v1376 = vmul.f32 %v993, %v1340
    %v1377 = vmul.f32 %v998, %v1340
    %v1378 = vmul.f32 %v1003, %v1340
    %v1379 = vmul.f32 %v1008, %v1340
    %v1380 = vmul.f32 %v1013, %v1340
    %v1381 = vmul.f32 %v1018, %v1340
    %v1382 = vmul.f32 %v1023, %v1340
    %v1383 = vmul.f32 %v1028, %v1340
    %v1384 = vmul.f32 %v1033, %v1340
    %v1385 = vmul.f32 %v1038, %v1340
    %v1386 = vmul.f32 %v1043, %v1340
    %v1387 = vmul.f32 %v1048, %v1340
    %v1388 = vmul.f32 %v1053, %v1340
    %v1389 = vmul.f32 %v1058, %v1340
    %v1390 = vmul.f32 %v1063, %v1340
    %v1391 = vmul.f32 %v1068, %v1340
    %v1392 = vmul.f32 %v1073, %v1340
    %v1393 = vmul.f32 %v1078, %v1340
    %v1394 = vmul.f32 %v1083, %v1340
    %v1395 = vmul.f32 %v1088, %v1340
    %v1396 = vmul.f32 %v1093, %v1340
    %v1397 = vmul.f32 %v1098, %v1340
    %v1398 = vmul.f32 %v1103, %v1340
    %v1399 = vmul.f32 %v1108, %v1340
    %v1400 = vmul.f32 %v1113, %v1340
    %v1401 = vmul.f32 %v1118, %v1340
    %v1402 = vmul.f32 %v1123, %v1340
    %v1403 = vmul.f32 %v1128, %v1340
    %v1404 = vmul.f32 %v1133, %v1340
    %1405 = vst.msk [vmem:[%s4] sm:$0xff] %vm101, %v1341
    %1406 = vst.msk [vmem:[%s4 + $0x8] sm:$0xff] %vm101, %v1342
    %1407 = vst.msk [vmem:[%s4 + $0x10] sm:$0xff] %vm101, %v1343
    %1408 = vst.msk [vmem:[%s4 + $0x18] sm:$0xff] %vm101, %v1344
    %1409 = vst.msk [vmem:[%s4 + $0x20] sm:$0xff] %vm101, %v1345
    %1410 = vst.msk [vmem:[%s4 + $0x28] sm:$0xff] %vm101, %v1346
    %1411 = vst.msk [vmem:[%s4 + $0x30] sm:$0xff] %vm101, %v1347
    %1412 = vst.msk [vmem:[%s4 + $0x38] sm:$0xff] %vm101, %v1348
    %1413 = vst.msk [vmem:[%s4 + $0x40] sm:$0xff] %vm101, %v1349
    %1414 = vst.msk [vmem:[%s4 + $0x48] sm:$0xff] %vm101, %v1350
    %1415 = vst.msk [vmem:[%s4 + $0x50] sm:$0xff] %vm101, %v1351
    %1416 = vst.msk [vmem:[%s4 + $0x58] sm:$0xff] %vm101, %v1352
    %1417 = vst.msk [vmem:[%s4 + $0x60] sm:$0xff] %vm101, %v1353
    %1418 = vst.msk [vmem:[%s4 + $0x68] sm:$0xff] %vm101, %v1354
    %1419 = vst.msk [vmem:[%s4 + $0x70] sm:$0xff] %vm101, %v1355
    %1420 = vst.msk [vmem:[%s4 + $0x78] sm:$0xff] %vm101, %v1356
    %1421 = vst.msk [vmem:[%s4 + $0x80] sm:$0xff] %vm101, %v1357
    %1422 = vst.msk [vmem:[%s4 + $0x88] sm:$0xff] %vm101, %v1358
    %1423 = vst.msk [vmem:[%s4 + $0x90] sm:$0xff] %vm101, %v1359
    %1424 = vst.msk [vmem:[%s4 + $0x98] sm:$0xff] %vm101, %v1360
    %1425 = vst.msk [vmem:[%s4 + $0xa0] sm:$0xff] %vm101, %v1361
    %1426 = vst.msk [vmem:[%s4 + $0xa8] sm:$0xff] %vm101, %v1362
    %1427 = vst.msk [vmem:[%s4 + $0xb0] sm:$0xff] %vm101, %v1363
    %1428 = vst.msk [vmem:[%s4 + $0xb8] sm:$0xff] %vm101, %v1364
    %1429 = vst.msk [vmem:[%s4 + $0xc0] sm:$0xff] %vm101, %v1365
    %1430 = vst.msk [vmem:[%s4 + $0xc8] sm:$0xff] %vm101, %v1366
    %1431 = vst.msk [vmem:[%s4 + $0xd0] sm:$0xff] %vm101, %v1367
    %1432 = vst.msk [vmem:[%s4 + $0xd8] sm:$0xff] %vm101, %v1368
    %1433 = vst.msk [vmem:[%s4 + $0xe0] sm:$0xff] %vm101, %v1369
    %1434 = vst.msk [vmem:[%s4 + $0xe8] sm:$0xff] %vm101, %v1370
    %1435 = vst.msk [vmem:[%s4 + $0xf0] sm:$0xff] %vm101, %v1371
    %1436 = vst.msk [vmem:[%s4 + $0xf8] sm:$0xff] %vm101, %v1372
    %1437 = vst.msk [vmem:[%s4 + $0x100] sm:$0xff] %vm101, %v1373
    %1438 = vst.msk [vmem:[%s4 + $0x108] sm:$0xff] %vm101, %v1374
    %1439 = vst.msk [vmem:[%s4 + $0x110] sm:$0xff] %vm101, %v1375
    %1440 = vst.msk [vmem:[%s4 + $0x118] sm:$0xff] %vm101, %v1376
    %1441 = vst.msk [vmem:[%s4 + $0x120] sm:$0xff] %vm101, %v1377
    %1442 = vst.msk [vmem:[%s4 + $0x128] sm:$0xff] %vm101, %v1378
    %1443 = vst.msk [vmem:[%s4 + $0x130] sm:$0xff] %vm101, %v1379
    %1444 = vst.msk [vmem:[%s4 + $0x138] sm:$0xff] %vm101, %v1380
    %1445 = vst.msk [vmem:[%s4 + $0x140] sm:$0xff] %vm101, %v1381
    %1446 = vst.msk [vmem:[%s4 + $0x148] sm:$0xff] %vm101, %v1382
    %1447 = vst.msk [vmem:[%s4 + $0x150] sm:$0xff] %vm101, %v1383
    %1448 = vst.msk [vmem:[%s4 + $0x158] sm:$0xff] %vm101, %v1384
    %1449 = vst.msk [vmem:[%s4 + $0x160] sm:$0xff] %vm101, %v1385
    %1450 = vst.msk [vmem:[%s4 + $0x168] sm:$0xff] %vm101, %v1386
    %1451 = vst.msk [vmem:[%s4 + $0x170] sm:$0xff] %vm101, %v1387
    %1452 = vst.msk [vmem:[%s4 + $0x178] sm:$0xff] %vm101, %v1388
    %1453 = vst.msk [vmem:[%s4 + $0x180] sm:$0xff] %vm101, %v1389
    %1454 = vst.msk [vmem:[%s4 + $0x188] sm:$0xff] %vm101, %v1390
    %1455 = vst.msk [vmem:[%s4 + $0x190] sm:$0xff] %vm101, %v1391
    %1456 = vst.msk [vmem:[%s4 + $0x198] sm:$0xff] %vm101, %v1392
    %1457 = vst.msk [vmem:[%s4 + $0x1a0] sm:$0xff] %vm101, %v1393
    %1458 = vst.msk [vmem:[%s4 + $0x1a8] sm:$0xff] %vm101, %v1394
    %1459 = vst.msk [vmem:[%s4 + $0x1b0] sm:$0xff] %vm101, %v1395
    %1460 = vst.msk [vmem:[%s4 + $0x1b8] sm:$0xff] %vm101, %v1396
    %1461 = vst.msk [vmem:[%s4 + $0x1c0] sm:$0xff] %vm101, %v1397
    %1462 = vst.msk [vmem:[%s4 + $0x1c8] sm:$0xff] %vm101, %v1398
    %1463 = vst.msk [vmem:[%s4 + $0x1d0] sm:$0xff] %vm101, %v1399
    %1464 = vst.msk [vmem:[%s4 + $0x1d8] sm:$0xff] %vm101, %v1400
    %1465 = vst.msk [vmem:[%s4 + $0x1e0] sm:$0xff] %vm101, %v1401
    %1466 = vst.msk [vmem:[%s4 + $0x1e8] sm:$0xff] %vm101, %v1402
    %1467 = vst.msk [vmem:[%s4 + $0x1f0] sm:$0xff] %vm101, %v1403
    %1468 = vst.msk [vmem:[%s4 + $0x1f8] sm:$0xff] %vm101, %v1404
    %v1469 = vld [vmem:[#allocation2 + $0x4] sm:$0xf]
    %v1471 = vsel %vm747, %v1469, 0
    %1473 = vmatprep.subr.mxu0 0.0
    %1474 = vmatpush1.msra.mxu0 0.0
    %1475 = vmatprep.subr.mxu0 0.0
    %1476 = vmatpush1.msra.mxu0 0.0
    %1477 = vmatprep.subr.mxu0 0.0
    %1478 = vmatpush1.msra.mxu0 0.0
    %1479 = vmatprep.subr.mxu0 0.0
    %1480 = vmatpush1.msra.mxu0 0.0
    %1481 = vmatprep.subr.mxu0 0.0
    %1482 = vmatpush1.msra.mxu0 0.0
    %1483 = vmatprep.subr.mxu0 0.0
    %1484 = vmatpush1.msra.mxu0 0.0
    %1485 = vmatprep.subr.mxu0 0.0
    %1486 = vmatpush1.msra.mxu0 0.0
    %1487 = vmatprep.subr.mxu0 0.0
    %1488 = vmatpush1.msra.mxu0 0.0
    %1489 = vmatprep.subr.mxu0 0.0
    %1490 = vmatpush1.msra.mxu0 0.0
    %1491 = vmatprep.subr.mxu0 0.0
    %1492 = vmatpush1.msra.mxu0 0.0
    %1493 = vmatprep.subr.mxu0 0.0
    %1494 = vmatpush1.msra.mxu0 0.0
    %1495 = vmatprep.subr.mxu0 0.0
    %1496 = vmatpush1.msra.mxu0 0.0
    %1497 = vmatprep.subr.mxu0 0.0
    %1498 = vmatpush1.msra.mxu0 0.0
    %1499 = vmatprep.subr.mxu0 0.0
    %1500 = vmatpush1.msra.mxu0 0.0
    %1501 = vmatprep.subr.mxu0 0.0
    %1502 = vmatpush1.msra.mxu0 0.0
    %1503 = vmatprep.subr.mxu0 0.0
    %1504 = vmatpush1.msra.mxu0 %v1471
    %1505 = vmatprep.subr.mxu0 0.0
    %1506 = vmatpush2.msra.mxu0 0.0
    %1507 = vmatprep.subr.mxu0 0.0
    %1508 = vmatpush2.msra.mxu0 0.0
    %1509 = vmatprep.subr.mxu0 0.0
    %1510 = vmatpush2.msra.mxu0 0.0
    %1511 = vmatprep.subr.mxu0 0.0
    %1512 = vmatpush2.msra.mxu0 0.0
    %1513 = vmatprep.subr.mxu0 0.0
    %1514 = vmatpush2.msra.mxu0 0.0
    %1515 = vmatprep.subr.mxu0 0.0
    %1516 = vmatpush2.msra.mxu0 0.0
    %1517 = vmatprep.subr.mxu0 0.0
    %1518 = vmatpush2.msra.mxu0 0.0
    %1519 = vmatprep.subr.mxu0 0.0
    %1520 = vmatpush2.msra.mxu0 0.0
    %1521 = vmatprep.subr.mxu0 0.0
    %1522 = vmatpush2.msra.mxu0 0.0
    %1523 = vmatprep.subr.mxu0 0.0
    %1524 = vmatpush2.msra.mxu0 0.0
    %1525 = vmatprep.subr.mxu0 0.0
    %1526 = vmatpush2.msra.mxu0 0.0
    %1527 = vmatprep.subr.mxu0 0.0
    %1528 = vmatpush2.msra.mxu0 0.0
    %1529 = vmatprep.subr.mxu0 0.0
    %1530 = vmatpush2.msra.mxu0 0.0
    %1531 = vmatprep.subr.mxu0 0.0
    %1532 = vmatpush2.msra.mxu0 0.0
    %1533 = vmatprep.subr.mxu0 0.0
    %1534 = vmatpush2.msra.mxu0 0.0
    %1535 = vmatprep.subr.mxu0 0.0
    %1536 = vmatpush2.msra.mxu0 0.0
    %1537 = vmatprep.mubr.f32.mxu0 0.0
    %1538 = vmatmul.mubr.f32.gmra.mxu0 %v556
    %v1539 = vpop.f32.mrf.mxu0
    %v1540 = vadd.f32 %v238, %v1539
    %v1541 = vpop.f32.mrf.mxu0
    %1542 = vmatprep.mubr.f32.mxu0 0.0
    %1543 = vmatmul.mubr.f32.gmra.mxu0 %v559
    %v1544 = vpop.f32.mrf.mxu0
    %v1545 = vadd.f32 %v243, %v1544
    %v1546 = vpop.f32.mrf.mxu0
    %1547 = vmatprep.mubr.f32.mxu0 0.0
    %1548 = vmatmul.mubr.f32.gmra.mxu0 %v562
    %v1549 = vpop.f32.mrf.mxu0
    %v1550 = vadd.f32 %v248, %v1549
    %v1551 = vpop.f32.mrf.mxu0
    %1552 = vmatprep.mubr.f32.mxu0 0.0
    %1553 = vmatmul.mubr.f32.gmra.mxu0 %v565
    %v1554 = vpop.f32.mrf.mxu0
    %v1555 = vadd.f32 %v253, %v1554
    %v1556 = vpop.f32.mrf.mxu0
    %1557 = vmatprep.mubr.f32.mxu0 0.0
    %1558 = vmatmul.mubr.f32.gmra.mxu0 %v568
    %v1559 = vpop.f32.mrf.mxu0
    %v1560 = vadd.f32 %v258, %v1559
    %v1561 = vpop.f32.mrf.mxu0
    %1562 = vmatprep.mubr.f32.mxu0 0.0
    %1563 = vmatmul.mubr.f32.gmra.mxu0 %v571
    %v1564 = vpop.f32.mrf.mxu0
    %v1565 = vadd.f32 %v263, %v1564
    %v1566 = vpop.f32.mrf.mxu0
    %1567 = vmatprep.mubr.f32.mxu0 0.0
    %1568 = vmatmul.mubr.f32.gmra.mxu0 %v574
    %v1569 = vpop.f32.mrf.mxu0
    %v1570 = vadd.f32 %v268, %v1569
    %v1571 = vpop.f32.mrf.mxu0
    %1572 = vmatprep.mubr.f32.mxu0 0.0
    %1573 = vmatmul.mubr.f32.gmra.mxu0 %v577
    %v1574 = vpop.f32.mrf.mxu0
    %v1575 = vadd.f32 %v273, %v1574
    %v1576 = vpop.f32.mrf.mxu0
    %1577 = vmatprep.mubr.f32.mxu0 0.0
    %1578 = vmatmul.mubr.f32.gmra.mxu0 %v580
    %v1579 = vpop.f32.mrf.mxu0
    %v1580 = vadd.f32 %v278, %v1579
    %v1581 = vpop.f32.mrf.mxu0
    %1582 = vmatprep.mubr.f32.mxu0 0.0
    %1583 = vmatmul.mubr.f32.gmra.mxu0 %v583
    %v1584 = vpop.f32.mrf.mxu0
    %v1585 = vadd.f32 %v283, %v1584
    %v1586 = vpop.f32.mrf.mxu0
    %1587 = vmatprep.mubr.f32.mxu0 0.0
    %1588 = vmatmul.mubr.f32.gmra.mxu0 %v586
    %v1589 = vpop.f32.mrf.mxu0
    %v1590 = vadd.f32 %v288, %v1589
    %v1591 = vpop.f32.mrf.mxu0
    %1592 = vmatprep.mubr.f32.mxu0 0.0
    %1593 = vmatmul.mubr.f32.gmra.mxu0 %v589
    %v1594 = vpop.f32.mrf.mxu0
    %v1595 = vadd.f32 %v293, %v1594
    %v1596 = vpop.f32.mrf.mxu0
    %1597 = vmatprep.mubr.f32.mxu0 0.0
    %1598 = vmatmul.mubr.f32.gmra.mxu0 %v592
    %v1599 = vpop.f32.mrf.mxu0
    %v1600 = vadd.f32 %v298, %v1599
    %v1601 = vpop.f32.mrf.mxu0
    %1602 = vmatprep.mubr.f32.mxu0 0.0
    %1603 = vmatmul.mubr.f32.gmra.mxu0 %v595
    %v1604 = vpop.f32.mrf.mxu0
    %v1605 = vadd.f32 %v303, %v1604
    %v1606 = vpop.f32.mrf.mxu0
    %1607 = vmatprep.mubr.f32.mxu0 0.0
    %1608 = vmatmul.mubr.f32.gmra.mxu0 %v598
    %v1609 = vpop.f32.mrf.mxu0
    %v1610 = vadd.f32 %v308, %v1609
    %v1611 = vpop.f32.mrf.mxu0
    %1612 = vmatprep.mubr.f32.mxu0 0.0
    %1613 = vmatmul.mubr.f32.gmra.mxu0 %v601
    %v1614 = vpop.f32.mrf.mxu0
    %v1615 = vadd.f32 %v313, %v1614
    %v1616 = vpop.f32.mrf.mxu0
    %1617 = vmatprep.mubr.f32.mxu0 0.0
    %1618 = vmatmul.mubr.f32.gmra.mxu0 %v604
    %v1619 = vpop.f32.mrf.mxu0
    %v1620 = vadd.f32 %v318, %v1619
    %v1621 = vpop.f32.mrf.mxu0
    %1622 = vmatprep.mubr.f32.mxu0 0.0
    %1623 = vmatmul.mubr.f32.gmra.mxu0 %v607
    %v1624 = vpop.f32.mrf.mxu0
    %v1625 = vadd.f32 %v323, %v1624
    %v1626 = vpop.f32.mrf.mxu0
    %1627 = vmatprep.mubr.f32.mxu0 0.0
    %1628 = vmatmul.mubr.f32.gmra.mxu0 %v610
    %v1629 = vpop.f32.mrf.mxu0
    %v1630 = vadd.f32 %v328, %v1629
    %v1631 = vpop.f32.mrf.mxu0
    %1632 = vmatprep.mubr.f32.mxu0 0.0
    %1633 = vmatmul.mubr.f32.gmra.mxu0 %v613
    %v1634 = vpop.f32.mrf.mxu0
    %v1635 = vadd.f32 %v333, %v1634
    %v1636 = vpop.f32.mrf.mxu0
    %1637 = vmatprep.mubr.f32.mxu0 0.0
    %1638 = vmatmul.mubr.f32.gmra.mxu0 %v616
    %v1639 = vpop.f32.mrf.mxu0
    %v1640 = vadd.f32 %v338, %v1639
    %v1641 = vpop.f32.mrf.mxu0
    %1642 = vmatprep.mubr.f32.mxu0 0.0
    %1643 = vmatmul.mubr.f32.gmra.mxu0 %v619
    %v1644 = vpop.f32.mrf.mxu0
    %v1645 = vadd.f32 %v343, %v1644
    %v1646 = vpop.f32.mrf.mxu0
    %1647 = vmatprep.mubr.f32.mxu0 0.0
    %1648 = vmatmul.mubr.f32.gmra.mxu0 %v622
    %v1649 = vpop.f32.mrf.mxu0
    %v1650 = vadd.f32 %v348, %v1649
    %v1651 = vpop.f32.mrf.mxu0
    %1652 = vmatprep.mubr.f32.mxu0 0.0
    %1653 = vmatmul.mubr.f32.gmra.mxu0 %v625
    %v1654 = vpop.f32.mrf.mxu0
    %v1655 = vadd.f32 %v353, %v1654
    %v1656 = vpop.f32.mrf.mxu0
    %1657 = vmatprep.mubr.f32.mxu0 0.0
    %1658 = vmatmul.mubr.f32.gmra.mxu0 %v628
    %v1659 = vpop.f32.mrf.mxu0
    %v1660 = vadd.f32 %v358, %v1659
    %v1661 = vpop.f32.mrf.mxu0
    %1662 = vmatprep.mubr.f32.mxu0 0.0
    %1663 = vmatmul.mubr.f32.gmra.mxu0 %v631
    %v1664 = vpop.f32.mrf.mxu0
    %v1665 = vadd.f32 %v363, %v1664
    %v1666 = vpop.f32.mrf.mxu0
    %1667 = vmatprep.mubr.f32.mxu0 0.0
    %1668 = vmatmul.mubr.f32.gmra.mxu0 %v634
    %v1669 = vpop.f32.mrf.mxu0
    %v1670 = vadd.f32 %v368, %v1669
    %v1671 = vpop.f32.mrf.mxu0
    %1672 = vmatprep.mubr.f32.mxu0 0.0
    %1673 = vmatmul.mubr.f32.gmra.mxu0 %v637
    %v1674 = vpop.f32.mrf.mxu0
    %v1675 = vadd.f32 %v373, %v1674
    %v1676 = vpop.f32.mrf.mxu0
    %1677 = vmatprep.mubr.f32.mxu0 0.0
    %1678 = vmatmul.mubr.f32.gmra.mxu0 %v640
    %v1679 = vpop.f32.mrf.mxu0
    %v1680 = vadd.f32 %v378, %v1679
    %v1681 = vpop.f32.mrf.mxu0
    %1682 = vmatprep.mubr.f32.mxu0 0.0
    %1683 = vmatmul.mubr.f32.gmra.mxu0 %v643
    %v1684 = vpop.f32.mrf.mxu0
    %v1685 = vadd.f32 %v383, %v1684
    %v1686 = vpop.f32.mrf.mxu0
    %1687 = vmatprep.mubr.f32.mxu0 0.0
    %1688 = vmatmul.mubr.f32.gmra.mxu0 %v646
    %v1689 = vpop.f32.mrf.mxu0
    %v1690 = vadd.f32 %v388, %v1689
    %v1691 = vpop.f32.mrf.mxu0
    %1692 = vmatprep.mubr.f32.mxu0 0.0
    %1693 = vmatmul.mubr.f32.gmra.mxu0 %v649
    %v1694 = vpop.f32.mrf.mxu0
    %v1695 = vadd.f32 %v393, %v1694
    %v1696 = vpop.f32.mrf.mxu0
    %1697 = vmatprep.mubr.f32.mxu0 0.0
    %1698 = vmatmul.mubr.f32.gmra.mxu0 %v652
    %v1699 = vpop.f32.mrf.mxu0
    %v1700 = vadd.f32 %v398, %v1699
    %v1701 = vpop.f32.mrf.mxu0
    %1702 = vmatprep.mubr.f32.mxu0 0.0
    %1703 = vmatmul.mubr.f32.gmra.mxu0 %v655
    %v1704 = vpop.f32.mrf.mxu0
    %v1705 = vadd.f32 %v403, %v1704
    %v1706 = vpop.f32.mrf.mxu0
    %1707 = vmatprep.mubr.f32.mxu0 0.0
    %1708 = vmatmul.mubr.f32.gmra.mxu0 %v658
    %v1709 = vpop.f32.mrf.mxu0
    %v1710 = vadd.f32 %v408, %v1709
    %v1711 = vpop.f32.mrf.mxu0
    %1712 = vmatprep.mubr.f32.mxu0 0.0
    %1713 = vmatmul.mubr.f32.gmra.mxu0 %v661
    %v1714 = vpop.f32.mrf.mxu0
    %v1715 = vadd.f32 %v413, %v1714
    %v1716 = vpop.f32.mrf.mxu0
    %1717 = vmatprep.mubr.f32.mxu0 0.0
    %1718 = vmatmul.mubr.f32.gmra.mxu0 %v664
    %v1719 = vpop.f32.mrf.mxu0
    %v1720 = vadd.f32 %v418, %v1719
    %v1721 = vpop.f32.mrf.mxu0
    %1722 = vmatprep.mubr.f32.mxu0 0.0
    %1723 = vmatmul.mubr.f32.gmra.mxu0 %v667
    %v1724 = vpop.f32.mrf.mxu0
    %v1725 = vadd.f32 %v423, %v1724
    %v1726 = vpop.f32.mrf.mxu0
    %1727 = vmatprep.mubr.f32.mxu0 0.0
    %1728 = vmatmul.mubr.f32.gmra.mxu0 %v670
    %v1729 = vpop.f32.mrf.mxu0
    %v1730 = vadd.f32 %v428, %v1729
    %v1731 = vpop.f32.mrf.mxu0
    %1732 = vmatprep.mubr.f32.mxu0 0.0
    %1733 = vmatmul.mubr.f32.gmra.mxu0 %v673
    %v1734 = vpop.f32.mrf.mxu0
    %v1735 = vadd.f32 %v433, %v1734
    %v1736 = vpop.f32.mrf.mxu0
    %1737 = vmatprep.mubr.f32.mxu0 0.0
    %1738 = vmatmul.mubr.f32.gmra.mxu0 %v676
    %v1739 = vpop.f32.mrf.mxu0
    %v1740 = vadd.f32 %v438, %v1739
    %v1741 = vpop.f32.mrf.mxu0
    %1742 = vmatprep.mubr.f32.mxu0 0.0
    %1743 = vmatmul.mubr.f32.gmra.mxu0 %v679
    %v1744 = vpop.f32.mrf.mxu0
    %v1745 = vadd.f32 %v443, %v1744
    %v1746 = vpop.f32.mrf.mxu0
    %1747 = vmatprep.mubr.f32.mxu0 0.0
    %1748 = vmatmul.mubr.f32.gmra.mxu0 %v682
    %v1749 = vpop.f32.mrf.mxu0
    %v1750 = vadd.f32 %v448, %v1749
    %v1751 = vpop.f32.mrf.mxu0
    %1752 = vmatprep.mubr.f32.mxu0 0.0
    %1753 = vmatmul.mubr.f32.gmra.mxu0 %v685
    %v1754 = vpop.f32.mrf.mxu0
    %v1755 = vadd.f32 %v453, %v1754
    %v1756 = vpop.f32.mrf.mxu0
    %1757 = vmatprep.mubr.f32.mxu0 0.0
    %1758 = vmatmul.mubr.f32.gmra.mxu0 %v688
    %v1759 = vpop.f32.mrf.mxu0
    %v1760 = vadd.f32 %v458, %v1759
    %v1761 = vpop.f32.mrf.mxu0
    %1762 = vmatprep.mubr.f32.mxu0 0.0
    %1763 = vmatmul.mubr.f32.gmra.mxu0 %v691
    %v1764 = vpop.f32.mrf.mxu0
    %v1765 = vadd.f32 %v463, %v1764
    %v1766 = vpop.f32.mrf.mxu0
    %1767 = vmatprep.mubr.f32.mxu0 0.0
    %1768 = vmatmul.mubr.f32.gmra.mxu0 %v694
    %v1769 = vpop.f32.mrf.mxu0
    %v1770 = vadd.f32 %v468, %v1769
    %v1771 = vpop.f32.mrf.mxu0
    %1772 = vmatprep.mubr.f32.mxu0 0.0
    %1773 = vmatmul.mubr.f32.gmra.mxu0 %v697
    %v1774 = vpop.f32.mrf.mxu0
    %v1775 = vadd.f32 %v473, %v1774
    %v1776 = vpop.f32.mrf.mxu0
    %1777 = vmatprep.mubr.f32.mxu0 0.0
    %1778 = vmatmul.mubr.f32.gmra.mxu0 %v700
    %v1779 = vpop.f32.mrf.mxu0
    %v1780 = vadd.f32 %v478, %v1779
    %v1781 = vpop.f32.mrf.mxu0
    %1782 = vmatprep.mubr.f32.mxu0 0.0
    %1783 = vmatmul.mubr.f32.gmra.mxu0 %v703
    %v1784 = vpop.f32.mrf.mxu0
    %v1785 = vadd.f32 %v483, %v1784
    %v1786 = vpop.f32.mrf.mxu0
    %1787 = vmatprep.mubr.f32.mxu0 0.0
    %1788 = vmatmul.mubr.f32.gmra.mxu0 %v706
    %v1789 = vpop.f32.mrf.mxu0
    %v1790 = vadd.f32 %v488, %v1789
    %v1791 = vpop.f32.mrf.mxu0
    %1792 = vmatprep.mubr.f32.mxu0 0.0
    %1793 = vmatmul.mubr.f32.gmra.mxu0 %v709
    %v1794 = vpop.f32.mrf.mxu0
    %v1795 = vadd.f32 %v493, %v1794
    %v1796 = vpop.f32.mrf.mxu0
    %1797 = vmatprep.mubr.f32.mxu0 0.0
    %1798 = vmatmul.mubr.f32.gmra.mxu0 %v712
    %v1799 = vpop.f32.mrf.mxu0
    %v1800 = vadd.f32 %v498, %v1799
    %v1801 = vpop.f32.mrf.mxu0
    %1802 = vmatprep.mubr.f32.mxu0 0.0
    %1803 = vmatmul.mubr.f32.gmra.mxu0 %v715
    %v1804 = vpop.f32.mrf.mxu0
    %v1805 = vadd.f32 %v503, %v1804
    %v1806 = vpop.f32.mrf.mxu0
    %1807 = vmatprep.mubr.f32.mxu0 0.0
    %1808 = vmatmul.mubr.f32.gmra.mxu0 %v718
    %v1809 = vpop.f32.mrf.mxu0
    %v1810 = vadd.f32 %v508, %v1809
    %v1811 = vpop.f32.mrf.mxu0
    %1812 = vmatprep.mubr.f32.mxu0 0.0
    %1813 = vmatmul.mubr.f32.gmra.mxu0 %v721
    %v1814 = vpop.f32.mrf.mxu0
    %v1815 = vadd.f32 %v513, %v1814
    %v1816 = vpop.f32.mrf.mxu0
    %1817 = vmatprep.mubr.f32.mxu0 0.0
    %1818 = vmatmul.mubr.f32.gmra.mxu0 %v724
    %v1819 = vpop.f32.mrf.mxu0
    %v1820 = vadd.f32 %v518, %v1819
    %v1821 = vpop.f32.mrf.mxu0
    %1822 = vmatprep.mubr.f32.mxu0 0.0
    %1823 = vmatmul.mubr.f32.gmra.mxu0 %v727
    %v1824 = vpop.f32.mrf.mxu0
    %v1825 = vadd.f32 %v523, %v1824
    %v1826 = vpop.f32.mrf.mxu0
    %1827 = vmatprep.mubr.f32.mxu0 0.0
    %1828 = vmatmul.mubr.f32.gmra.mxu0 %v730
    %v1829 = vpop.f32.mrf.mxu0
    %v1830 = vadd.f32 %v528, %v1829
    %v1831 = vpop.f32.mrf.mxu0
    %1832 = vmatprep.mubr.f32.mxu0 0.0
    %1833 = vmatmul.mubr.f32.gmra.mxu0 %v733
    %v1834 = vpop.f32.mrf.mxu0
    %v1835 = vadd.f32 %v533, %v1834
    %v1836 = vpop.f32.mrf.mxu0
    %1837 = vmatprep.mubr.f32.mxu0 0.0
    %1838 = vmatmul.mubr.f32.gmra.mxu0 %v736
    %v1839 = vpop.f32.mrf.mxu0
    %v1840 = vadd.f32 %v538, %v1839
    %v1841 = vpop.f32.mrf.mxu0
    %1842 = vmatprep.mubr.f32.mxu0 0.0
    %1843 = vmatmul.mubr.f32.gmra.mxu0 %v739
    %v1844 = vpop.f32.mrf.mxu0
    %v1845 = vadd.f32 %v543, %v1844
    %v1846 = vpop.f32.mrf.mxu0
    %1847 = vmatprep.mubr.f32.mxu0 0.0
    %1848 = vmatmul.mubr.f32.gmra.mxu0 %v742
    %v1849 = vpop.f32.mrf.mxu0
    %v1850 = vadd.f32 %v548, %v1849
    %v1851 = vpop.f32.mrf.mxu0
    %1852 = vmatprep.mubr.f32.mxu0 0.0
    %1853 = vmatmul.mubr.f32.gmra.mxu0 %v745
    %v1854 = vpop.f32.mrf.mxu0
    %v1855 = vadd.f32 %v553, %v1854
    %v1856 = vpop.f32.mrf.mxu0
    %1857 = vdwg.mxu0
    %v1858 = vmul.f32 %v1540, %v1540
    %v1859 = vmul.f32 %v1545, %v1545
    %v1860 = vmul.f32 %v1550, %v1550
    %v1861 = vmul.f32 %v1555, %v1555
    %v1862 = vmul.f32 %v1560, %v1560
    %v1863 = vmul.f32 %v1565, %v1565
    %v1864 = vmul.f32 %v1570, %v1570
    %v1865 = vmul.f32 %v1575, %v1575
    %v1866 = vmul.f32 %v1580, %v1580
    %v1867 = vmul.f32 %v1585, %v1585
    %v1868 = vmul.f32 %v1590, %v1590
    %v1869 = vmul.f32 %v1595, %v1595
    %v1870 = vmul.f32 %v1600, %v1600
    %v1871 = vmul.f32 %v1605, %v1605
    %v1872 = vmul.f32 %v1610, %v1610
    %v1873 = vmul.f32 %v1615, %v1615
    %v1874 = vmul.f32 %v1620, %v1620
    %v1875 = vmul.f32 %v1625, %v1625
    %v1876 = vmul.f32 %v1630, %v1630
    %v1877 = vmul.f32 %v1635, %v1635
    %v1878 = vmul.f32 %v1640, %v1640
    %v1879 = vmul.f32 %v1645, %v1645
    %v1880 = vmul.f32 %v1650, %v1650
    %v1881 = vmul.f32 %v1655, %v1655
    %v1882 = vmul.f32 %v1660, %v1660
    %v1883 = vmul.f32 %v1665, %v1665
    %v1884 = vmul.f32 %v1670, %v1670
    %v1885 = vmul.f32 %v1675, %v1675
    %v1886 = vmul.f32 %v1680, %v1680
    %v1887 = vmul.f32 %v1685, %v1685
    %v1888 = vmul.f32 %v1690, %v1690
    %v1889 = vmul.f32 %v1695, %v1695
    %v1890 = vmul.f32 %v1700, %v1700
    %v1891 = vmul.f32 %v1705, %v1705
    %v1892 = vmul.f32 %v1710, %v1710
    %v1893 = vmul.f32 %v1715, %v1715
    %v1894 = vmul.f32 %v1720, %v1720
    %v1895 = vmul.f32 %v1725, %v1725
    %v1896 = vmul.f32 %v1730, %v1730
    %v1897 = vmul.f32 %v1735, %v1735
    %v1898 = vmul.f32 %v1740, %v1740
    %v1899 = vmul.f32 %v1745, %v1745
    %v1900 = vmul.f32 %v1750, %v1750
    %v1901 = vmul.f32 %v1755, %v1755
    %v1902 = vmul.f32 %v1760, %v1760
    %v1903 = vmul.f32 %v1765, %v1765
    %v1904 = vmul.f32 %v1770, %v1770
    %v1905 = vmul.f32 %v1775, %v1775
    %v1906 = vmul.f32 %v1780, %v1780
    %v1907 = vmul.f32 %v1785, %v1785
    %v1908 = vmul.f32 %v1790, %v1790
    %v1909 = vmul.f32 %v1795, %v1795
    %v1910 = vmul.f32 %v1800, %v1800
    %v1911 = vmul.f32 %v1805, %v1805
    %v1912 = vmul.f32 %v1810, %v1810
    %v1913 = vmul.f32 %v1815, %v1815
    %v1914 = vmul.f32 %v1820, %v1820
    %v1915 = vmul.f32 %v1825, %v1825
    %v1916 = vmul.f32 %v1830, %v1830
    %v1917 = vmul.f32 %v1835, %v1835
    %v1918 = vmul.f32 %v1840, %v1840
    %v1919 = vmul.f32 %v1845, %v1845
    %v1920 = vmul.f32 %v1850, %v1850
    %v1921 = vmul.f32 %v1855, %v1855
    %v1922 = vsel %vm101, %v1858, 0.0
    %v1923 = vsel %vm101, %v1859, 0.0
    %v1924 = vadd.f32 %v1922, %v1923
    %v1925 = vsel %vm101, %v1860, 0.0
    %v1926 = vadd.f32 %v1924, %v1925
    %v1927 = vsel %vm101, %v1861, 0.0
    %v1928 = vadd.f32 %v1926, %v1927
    %v1929 = vsel %vm101, %v1862, 0.0
    %v1930 = vadd.f32 %v1928, %v1929
    %v1931 = vsel %vm101, %v1863, 0.0
    %v1932 = vadd.f32 %v1930, %v1931
    %v1933 = vsel %vm101, %v1864, 0.0
    %v1934 = vadd.f32 %v1932, %v1933
    %v1935 = vsel %vm101, %v1865, 0.0
    %v1936 = vadd.f32 %v1934, %v1935
    %v1937 = vsel %vm101, %v1866, 0.0
    %v1938 = vadd.f32 %v1936, %v1937
    %v1939 = vsel %vm101, %v1867, 0.0
    %v1940 = vadd.f32 %v1938, %v1939
    %v1941 = vsel %vm101, %v1868, 0.0
    %v1942 = vadd.f32 %v1940, %v1941
    %v1943 = vsel %vm101, %v1869, 0.0
    %v1944 = vadd.f32 %v1942, %v1943
    %v1945 = vsel %vm101, %v1870, 0.0
    %v1946 = vadd.f32 %v1944, %v1945
    %v1947 = vsel %vm101, %v1871, 0.0
    %v1948 = vadd.f32 %v1946, %v1947
    %v1949 = vsel %vm101, %v1872, 0.0
    %v1950 = vadd.f32 %v1948, %v1949
    %v1951 = vsel %vm101, %v1873, 0.0
    %v1952 = vadd.f32 %v1950, %v1951
    %v1953 = vsel %vm101, %v1874, 0.0
    %v1954 = vadd.f32 %v1952, %v1953
    %v1955 = vsel %vm101, %v1875, 0.0
    %v1956 = vadd.f32 %v1954, %v1955
    %v1957 = vsel %vm101, %v1876, 0.0
    %v1958 = vadd.f32 %v1956, %v1957
    %v1959 = vsel %vm101, %v1877, 0.0
    %v1960 = vadd.f32 %v1958, %v1959
    %v1961 = vsel %vm101, %v1878, 0.0
    %v1962 = vadd.f32 %v1960, %v1961
    %v1963 = vsel %vm101, %v1879, 0.0
    %v1964 = vadd.f32 %v1962, %v1963
    %v1965 = vsel %vm101, %v1880, 0.0
    %v1966 = vadd.f32 %v1964, %v1965
    %v1967 = vsel %vm101, %v1881, 0.0
    %v1968 = vadd.f32 %v1966, %v1967
    %v1969 = vsel %vm101, %v1882, 0.0
    %v1970 = vadd.f32 %v1968, %v1969
    %v1971 = vsel %vm101, %v1883, 0.0
    %v1972 = vadd.f32 %v1970, %v1971
    %v1973 = vsel %vm101, %v1884, 0.0
    %v1974 = vadd.f32 %v1972, %v1973
    %v1975 = vsel %vm101, %v1885, 0.0
    %v1976 = vadd.f32 %v1974, %v1975
    %v1977 = vsel %vm101, %v1886, 0.0
    %v1978 = vadd.f32 %v1976, %v1977
    %v1979 = vsel %vm101, %v1887, 0.0
    %v1980 = vadd.f32 %v1978, %v1979
    %v1981 = vsel %vm101, %v1888, 0.0
    %v1982 = vadd.f32 %v1980, %v1981
    %v1983 = vsel %vm101, %v1889, 0.0
    %v1984 = vadd.f32 %v1982, %v1983
    %v1985 = vsel %vm101, %v1890, 0.0
    %v1986 = vadd.f32 %v1984, %v1985
    %v1987 = vsel %vm101, %v1891, 0.0
    %v1988 = vadd.f32 %v1986, %v1987
    %v1989 = vsel %vm101, %v1892, 0.0
    %v1990 = vadd.f32 %v1988, %v1989
    %v1991 = vsel %vm101, %v1893, 0.0
    %v1992 = vadd.f32 %v1990, %v1991
    %v1993 = vsel %vm101, %v1894, 0.0
    %v1994 = vadd.f32 %v1992, %v1993
    %v1995 = vsel %vm101, %v1895, 0.0
    %v1996 = vadd.f32 %v1994, %v1995
    %v1997 = vsel %vm101, %v1896, 0.0
    %v1998 = vadd.f32 %v1996, %v1997
    %v1999 = vsel %vm101, %v1897, 0.0
    %v2000 = vadd.f32 %v1998, %v1999
    %v2001 = vsel %vm101, %v1898, 0.0
    %v2002 = vadd.f32 %v2000, %v2001
    %v2003 = vsel %vm101, %v1899, 0.0
    %v2004 = vadd.f32 %v2002, %v2003
    %v2005 = vsel %vm101, %v1900, 0.0
    %v2006 = vadd.f32 %v2004, %v2005
    %v2007 = vsel %vm101, %v1901, 0.0
    %v2008 = vadd.f32 %v2006, %v2007
    %v2009 = vsel %vm101, %v1902, 0.0
    %v2010 = vadd.f32 %v2008, %v2009
    %v2011 = vsel %vm101, %v1903, 0.0
    %v2012 = vadd.f32 %v2010, %v2011
    %v2013 = vsel %vm101, %v1904, 0.0
    %v2014 = vadd.f32 %v2012, %v2013
    %v2015 = vsel %vm101, %v1905, 0.0
    %v2016 = vadd.f32 %v2014, %v2015
    %v2017 = vsel %vm101, %v1906, 0.0
    %v2018 = vadd.f32 %v2016, %v2017
    %v2019 = vsel %vm101, %v1907, 0.0
    %v2020 = vadd.f32 %v2018, %v2019
    %v2021 = vsel %vm101, %v1908, 0.0
    %v2022 = vadd.f32 %v2020, %v2021
    %v2023 = vsel %vm101, %v1909, 0.0
    %v2024 = vadd.f32 %v2022, %v2023
    %v2025 = vsel %vm101, %v1910, 0.0
    %v2026 = vadd.f32 %v2024, %v2025
    %v2027 = vsel %vm101, %v1911, 0.0
    %v2028 = vadd.f32 %v2026, %v2027
    %v2029 = vsel %vm101, %v1912, 0.0
    %v2030 = vadd.f32 %v2028, %v2029
    %v2031 = vsel %vm101, %v1913, 0.0
    %v2032 = vadd.f32 %v2030, %v2031
    %v2033 = vsel %vm101, %v1914, 0.0
    %v2034 = vadd.f32 %v2032, %v2033
    %v2035 = vsel %vm101, %v1915, 0.0
    %v2036 = vadd.f32 %v2034, %v2035
    %v2037 = vsel %vm101, %v1916, 0.0
    %v2038 = vadd.f32 %v2036, %v2037
    %v2039 = vsel %vm101, %v1917, 0.0
    %v2040 = vadd.f32 %v2038, %v2039
    %v2041 = vsel %vm101, %v1918, 0.0
    %v2042 = vadd.f32 %v2040, %v2041
    %v2043 = vsel %vm101, %v1919, 0.0
    %v2044 = vadd.f32 %v2042, %v2043
    %v2045 = vsel %vm101, %v1920, 0.0
    %v2046 = vadd.f32 %v2044, %v2045
    %v2047 = vsel %vm101, %v1921, 0.0
    %v2048 = vadd.f32 %v2046, %v2047
    %2049 = vadd.xlane.f32.xlu0 %v2048
    %v2050 = vpop.xlane.xlu0 %2049
    %v2051 = vrot.slane %v2050, 4
    %v2052 = vadd.f32 %v2050, %v2051
    %v2053 = vrot.slane %v2052, 2
    %v2054 = vadd.f32 %v2052, %v2053
    %v2055 = vrot.slane %v2054, 1
    %v2056 = vadd.f32 %v2054, %v2055
    %s2057 = vtos %v2056
    %s2058 = smax.f32 %s2057, 1e-24
    %v2059 = vstv %s2058
    %v2060 = vrsqrt.pop %v2059
    %s2061 = vtos %v2060
    %v2062 = vstv %s2061
    %v2063 = vmul.f32 %v1540, %v2062
    %v2064 = vmul.f32 %v1545, %v2062
    %v2065 = vmul.f32 %v1550, %v2062
    %v2066 = vmul.f32 %v1555, %v2062
    %v2067 = vmul.f32 %v1560, %v2062
    %v2068 = vmul.f32 %v1565, %v2062
    %v2069 = vmul.f32 %v1570, %v2062
    %v2070 = vmul.f32 %v1575, %v2062
    %v2071 = vmul.f32 %v1580, %v2062
    %v2072 = vmul.f32 %v1585, %v2062
    %v2073 = vmul.f32 %v1590, %v2062
    %v2074 = vmul.f32 %v1595, %v2062
    %v2075 = vmul.f32 %v1600, %v2062
    %v2076 = vmul.f32 %v1605, %v2062
    %v2077 = vmul.f32 %v1610, %v2062
    %v2078 = vmul.f32 %v1615, %v2062
    %v2079 = vmul.f32 %v1620, %v2062
    %v2080 = vmul.f32 %v1625, %v2062
    %v2081 = vmul.f32 %v1630, %v2062
    %v2082 = vmul.f32 %v1635, %v2062
    %v2083 = vmul.f32 %v1640, %v2062
    %v2084 = vmul.f32 %v1645, %v2062
    %v2085 = vmul.f32 %v1650, %v2062
    %v2086 = vmul.f32 %v1655, %v2062
    %v2087 = vmul.f32 %v1660, %v2062
    %v2088 = vmul.f32 %v1665, %v2062
    %v2089 = vmul.f32 %v1670, %v2062
    %v2090 = vmul.f32 %v1675, %v2062
    %v2091 = vmul.f32 %v1680, %v2062
    %v2092 = vmul.f32 %v1685, %v2062
    %v2093 = vmul.f32 %v1690, %v2062
    %v2094 = vmul.f32 %v1695, %v2062
    %v2095 = vmul.f32 %v1700, %v2062
    %v2096 = vmul.f32 %v1705, %v2062
    %v2097 = vmul.f32 %v1710, %v2062
    %v2098 = vmul.f32 %v1715, %v2062
    %v2099 = vmul.f32 %v1720, %v2062
    %v2100 = vmul.f32 %v1725, %v2062
    %v2101 = vmul.f32 %v1730, %v2062
    %v2102 = vmul.f32 %v1735, %v2062
    %v2103 = vmul.f32 %v1740, %v2062
    %v2104 = vmul.f32 %v1745, %v2062
    %v2105 = vmul.f32 %v1750, %v2062
    %v2106 = vmul.f32 %v1755, %v2062
    %v2107 = vmul.f32 %v1760, %v2062
    %v2108 = vmul.f32 %v1765, %v2062
    %v2109 = vmul.f32 %v1770, %v2062
    %v2110 = vmul.f32 %v1775, %v2062
    %v2111 = vmul.f32 %v1780, %v2062
    %v2112 = vmul.f32 %v1785, %v2062
    %v2113 = vmul.f32 %v1790, %v2062
    %v2114 = vmul.f32 %v1795, %v2062
    %v2115 = vmul.f32 %v1800, %v2062
    %v2116 = vmul.f32 %v1805, %v2062
    %v2117 = vmul.f32 %v1810, %v2062
    %v2118 = vmul.f32 %v1815, %v2062
    %v2119 = vmul.f32 %v1820, %v2062
    %v2120 = vmul.f32 %v1825, %v2062
    %v2121 = vmul.f32 %v1830, %v2062
    %v2122 = vmul.f32 %v1835, %v2062
    %v2123 = vmul.f32 %v1840, %v2062
    %v2124 = vmul.f32 %v1845, %v2062
    %v2125 = vmul.f32 %v1850, %v2062
    %v2126 = vmul.f32 %v1855, %v2062
    %s2127 = scalar_lea.vmem %s4, 512
    %2128 = vst.msk [vmem:[%s2127] sm:$0xff] %vm101, %v2063
    %2129 = vst.msk [vmem:[%s2127 + $0x8] sm:$0xff] %vm101, %v2064
    %2130 = vst.msk [vmem:[%s2127 + $0x10] sm:$0xff] %vm101, %v2065
    %2131 = vst.msk [vmem:[%s2127 + $0x18] sm:$0xff] %vm101, %v2066
    %2132 = vst.msk [vmem:[%s2127 + $0x20] sm:$0xff] %vm101, %v2067
    %2133 = vst.msk [vmem:[%s2127 + $0x28] sm:$0xff] %vm101, %v2068
    %2134 = vst.msk [vmem:[%s2127 + $0x30] sm:$0xff] %vm101, %v2069
    %2135 = vst.msk [vmem:[%s2127 + $0x38] sm:$0xff] %vm101, %v2070
    %2136 = vst.msk [vmem:[%s2127 + $0x40] sm:$0xff] %vm101, %v2071
    %2137 = vst.msk [vmem:[%s2127 + $0x48] sm:$0xff] %vm101, %v2072
    %2138 = vst.msk [vmem:[%s2127 + $0x50] sm:$0xff] %vm101, %v2073
    %2139 = vst.msk [vmem:[%s2127 + $0x58] sm:$0xff] %vm101, %v2074
    %2140 = vst.msk [vmem:[%s2127 + $0x60] sm:$0xff] %vm101, %v2075
    %2141 = vst.msk [vmem:[%s2127 + $0x68] sm:$0xff] %vm101, %v2076
    %2142 = vst.msk [vmem:[%s2127 + $0x70] sm:$0xff] %vm101, %v2077
    %2143 = vst.msk [vmem:[%s2127 + $0x78] sm:$0xff] %vm101, %v2078
    %2144 = vst.msk [vmem:[%s2127 + $0x80] sm:$0xff] %vm101, %v2079
    %2145 = vst.msk [vmem:[%s2127 + $0x88] sm:$0xff] %vm101, %v2080
    %2146 = vst.msk [vmem:[%s2127 + $0x90] sm:$0xff] %vm101, %v2081
    %2147 = vst.msk [vmem:[%s2127 + $0x98] sm:$0xff] %vm101, %v2082
    %2148 = vst.msk [vmem:[%s2127 + $0xa0] sm:$0xff] %vm101, %v2083
    %2149 = vst.msk [vmem:[%s2127 + $0xa8] sm:$0xff] %vm101, %v2084
    %2150 = vst.msk [vmem:[%s2127 + $0xb0] sm:$0xff] %vm101, %v2085
    %2151 = vst.msk [vmem:[%s2127 + $0xb8] sm:$0xff] %vm101, %v2086
    %2152 = vst.msk [vmem:[%s2127 + $0xc0] sm:$0xff] %vm101, %v2087
    %2153 = vst.msk [vmem:[%s2127 + $0xc8] sm:$0xff] %vm101, %v2088
    %2154 = vst.msk [vmem:[%s2127 + $0xd0] sm:$0xff] %vm101, %v2089
    %2155 = vst.msk [vmem:[%s2127 + $0xd8] sm:$0xff] %vm101, %v2090
    %2156 = vst.msk [vmem:[%s2127 + $0xe0] sm:$0xff] %vm101, %v2091
    %2157 = vst.msk [vmem:[%s2127 + $0xe8] sm:$0xff] %vm101, %v2092
    %2158 = vst.msk [vmem:[%s2127 + $0xf0] sm:$0xff] %vm101, %v2093
    %2159 = vst.msk [vmem:[%s2127 + $0xf8] sm:$0xff] %vm101, %v2094
    %2160 = vst.msk [vmem:[%s2127 + $0x100] sm:$0xff] %vm101, %v2095
    %2161 = vst.msk [vmem:[%s2127 + $0x108] sm:$0xff] %vm101, %v2096
    %2162 = vst.msk [vmem:[%s2127 + $0x110] sm:$0xff] %vm101, %v2097
    %2163 = vst.msk [vmem:[%s2127 + $0x118] sm:$0xff] %vm101, %v2098
    %2164 = vst.msk [vmem:[%s2127 + $0x120] sm:$0xff] %vm101, %v2099
    %2165 = vst.msk [vmem:[%s2127 + $0x128] sm:$0xff] %vm101, %v2100
    %2166 = vst.msk [vmem:[%s2127 + $0x130] sm:$0xff] %vm101, %v2101
    %2167 = vst.msk [vmem:[%s2127 + $0x138] sm:$0xff] %vm101, %v2102
    %2168 = vst.msk [vmem:[%s2127 + $0x140] sm:$0xff] %vm101, %v2103
    %2169 = vst.msk [vmem:[%s2127 + $0x148] sm:$0xff] %vm101, %v2104
    %2170 = vst.msk [vmem:[%s2127 + $0x150] sm:$0xff] %vm101, %v2105
    %2171 = vst.msk [vmem:[%s2127 + $0x158] sm:$0xff] %vm101, %v2106
    %2172 = vst.msk [vmem:[%s2127 + $0x160] sm:$0xff] %vm101, %v2107
    %2173 = vst.msk [vmem:[%s2127 + $0x168] sm:$0xff] %vm101, %v2108
    %2174 = vst.msk [vmem:[%s2127 + $0x170] sm:$0xff] %vm101, %v2109
    %2175 = vst.msk [vmem:[%s2127 + $0x178] sm:$0xff] %vm101, %v2110
    %2176 = vst.msk [vmem:[%s2127 + $0x180] sm:$0xff] %vm101, %v2111
    %2177 = vst.msk [vmem:[%s2127 + $0x188] sm:$0xff] %vm101, %v2112
    %2178 = vst.msk [vmem:[%s2127 + $0x190] sm:$0xff] %vm101, %v2113
    %2179 = vst.msk [vmem:[%s2127 + $0x198] sm:$0xff] %vm101, %v2114
    %2180 = vst.msk [vmem:[%s2127 + $0x1a0] sm:$0xff] %vm101, %v2115
    %2181 = vst.msk [vmem:[%s2127 + $0x1a8] sm:$0xff] %vm101, %v2116
    %2182 = vst.msk [vmem:[%s2127 + $0x1b0] sm:$0xff] %vm101, %v2117
    %2183 = vst.msk [vmem:[%s2127 + $0x1b8] sm:$0xff] %vm101, %v2118
    %2184 = vst.msk [vmem:[%s2127 + $0x1c0] sm:$0xff] %vm101, %v2119
    %2185 = vst.msk [vmem:[%s2127 + $0x1c8] sm:$0xff] %vm101, %v2120
    %2186 = vst.msk [vmem:[%s2127 + $0x1d0] sm:$0xff] %vm101, %v2121
    %2187 = vst.msk [vmem:[%s2127 + $0x1d8] sm:$0xff] %vm101, %v2122
    %2188 = vst.msk [vmem:[%s2127 + $0x1e0] sm:$0xff] %vm101, %v2123
    %2189 = vst.msk [vmem:[%s2127 + $0x1e8] sm:$0xff] %vm101, %v2124
    %2190 = vst.msk [vmem:[%s2127 + $0x1f0] sm:$0xff] %vm101, %v2125
    %2191 = vst.msk [vmem:[%s2127 + $0x1f8] sm:$0xff] %vm101, %v2126
  $region25: #{image_conv_ap.1} parent=0 // pred_fallthru
    _
  // Predicated region
  $region26: #{image_conv_ap.1} parent=0 // pred_check
    _
  $region27: #{image_conv_ap.1} parent=0 // pred_check_branch
    %2193 = sbr.rel (0) target = $region29
  $region28: #{image_conv_ap.1} parent=0 // pred_region
    _
  $region29: #{image_conv_ap.1} parent=0 // pred_fallthru
    _
  // Predicated region
  $region30: #{image_conv_ap.1} parent=0 // pred_check
    _
  $region31: #{image_conv_ap.1} parent=0 // pred_check_branch
    %2195 = sbr.rel (0) target = $region33
  $region32: #{image_conv_ap.1} parent=0 // pred_region
    _
  $region33: #{image_conv_ap.1} parent=0 // pred_fallthru
    _

</llo_original>
